<compile_context>
chip_gen: v7x
topology: tpu7x:2x2x1
jax: 0.10.0
libtpu: 0.0.40
codegen_flags: <defaults>
</compile_context>

<pallas_src>
import math

import jax
import jax.numpy as jnp
import numpy as np
from jax import lax
from jax.experimental import pallas as pl
from jax.experimental.pallas import tpu as pltpu

N_FEATURE = 32
H1 = 1024
H2 = 128
H1_CHUNK = 256                      # fc1->fc2 K-chunk width (H1 // 256 = 4 chunks)


def _round_up(x, m):
    return ((x + m - 1) // m) * m


def scorer_kernel(x_ref,            # (tm, C)      f32
                  w1_ref, b1_ref,   # (C, 1024) bf16, (1, 1024) f32
                  w2_ref, b2_ref,   # (1024, 128) bf16, (1, 128) f32
                  wc_ref, bc_ref,   # (1, 128) f32,  (1, 1) f32
                  out_ref):         # (1, 1, tm)   f32  (lane-dense scores)
    tm = x_ref.shape[0]
    x_bf = x_ref[...].astype(jnp.bfloat16)                       # (tm, C)

    # fc1 -> relu -> fc2 accumulation, K-chunked over H1: each 256-column
    # slice of the hidden layer is computed, biased, relu'd, cast to bf16 and
    # immediately folded into the fc2 accumulator (no (tm, 1024) f32 tensor).
    def chunk_body(k, acc):
        off = pl.multiple_of(k * H1_CHUNK, H1_CHUNK)
        w1_c = w1_ref[:, pl.ds(off, H1_CHUNK)]                   # (C, 256)  bf16
        b1_c = b1_ref[:, pl.ds(off, H1_CHUNK)]                   # (1, 256)  f32
        h1_c = jnp.dot(x_bf, w1_c, preferred_element_type=jnp.float32)
        h1_c = jnp.maximum(h1_c + b1_c, 0.0)                     # (tm, 256) f32
        w2_c = w2_ref[pl.ds(off, H1_CHUNK), :]                   # (256, 128) bf16
        return acc + jnp.dot(h1_c.astype(jnp.bfloat16), w2_c,
                             preferred_element_type=jnp.float32)

    acc0 = jnp.zeros((tm, H2), jnp.float32)
    acc = lax.fori_loop(0, H1 // H1_CHUNK, chunk_body, acc0, unroll=True)

    h2 = jnp.maximum(acc + b2_ref[...], 0.0)                     # (tm, 128) f32

    # Classifier (K=128, N=1): VPU multiply, then an XLU transpose of the
    # (tm, 128) product so the per-row sum lands lane-dense as a (1, tm) row
    # (MXU stays free; the transpose/reduce ride otherwise-idle XLU slots).
    prod = h2 * wc_ref[...]                                      # (tm, 128) f32
    prod_t = jnp.transpose(prod)                                 # (128, tm) f32
    row = jnp.sum(prod_t, axis=0, keepdims=True) + bc_ref[...]   # (1, tm)
    out_ref[...] = jax.nn.sigmoid(row).reshape(1, 1, tm)


def _default_row_tile():
    """v5e/v6e: 128 MiB VMEM, single TensorCore -> bigger tiles amortize the
    per-grid-step overhead.  v7x / unknown: 64 MiB VMEM, 2 TCs -> keep tm at
    1024 so medium inputs still yield >= 2 grid steps."""
    try:
        kind = jax.devices()[0].device_kind.lower()
    except Exception:
        return 1024
    if "v5" in kind or "v6" in kind:
        return 2048
    return 1024


def scorer_forward(inputs, params, *, tm=None):
    """Pallas equivalent of Scorer.forward(inputs, is_training=False)
    (the only path `model.forward` exercises).

    inputs: (T, B, C) float32  ->  (T, B, 1) float32
    """
    w1, b1, w2, b2, wc, bc = params
    T, B, C = inputs.shape
    N = T * B
    x = inputs.reshape(N, C).astype(jnp.float32)

    if tm is None:
        tm = _default_row_tile()
    # Lane-multiple row tiles; cap so large inputs always give >= 2 grid steps
    # (keeps both v7x TensorCores busy via dimension_semantics=("parallel",)).
    half = _round_up(-(-N // 2), 128)
    tm_eff = max(128, min(tm, half))
    n_rows = _round_up(N, tm_eff)
    if n_rows != N:
        x = jnp.pad(x, ((0, n_rows - N), (0, 0)))
    n_tiles = n_rows // tm_eff

    # bf16 weights feed the MXU (f32 accumulation); biases / classifier stay f32.
    w1_bf = w1.astype(jnp.bfloat16)
    w2_bf = w2.astype(jnp.bfloat16)
    b1_row = b1.reshape(1, H1).astype(jnp.float32)
    b2_row = b2.reshape(1, H2).astype(jnp.float32)
    wc_row = wc.reshape(1, H2).astype(jnp.float32)
    bc_11 = bc.reshape(1, 1).astype(jnp.float32)

    out = pl.pallas_call(
        scorer_kernel,
        out_shape=jax.ShapeDtypeStruct((n_tiles, 1, tm_eff), jnp.float32),
        grid_spec=pltpu.PrefetchScalarGridSpec(
            num_scalar_prefetch=0,
            grid=(n_tiles,),
            in_specs=[
                pl.BlockSpec((tm_eff, C), lambda i: (i, 0)),   # x row tile
                pl.BlockSpec((C, H1), lambda i: (0, 0)),       # w1 (bf16), fetched once
                pl.BlockSpec((1, H1), lambda i: (0, 0)),       # b1
                pl.BlockSpec((H1, H2), lambda i: (0, 0)),      # w2 (bf16), fetched once
                pl.BlockSpec((1, H2), lambda i: (0, 0)),       # b2
                pl.BlockSpec((1, H2), lambda i: (0, 0)),       # wc (row)
                pl.BlockSpec((1, 1), lambda i: (0, 0)),        # bc
            ],
            out_specs=pl.BlockSpec((1, 1, tm_eff), lambda i: (i, 0, 0)),
        ),
        compiler_params=pltpu.CompilerParams(
            dimension_semantics=("parallel",),
            vmem_limit_bytes=48 * 1024 * 1024),
    )(x, w1_bf, b1_row, w2_bf, b2_row, wc_row, bc_11)

    # Padded rows produce sigmoid(bc) values; slice them off before reshaping.
    return out.reshape(-1)[:N].reshape(T, B, 1)


def init_params(key, n_feature):
    """Deterministic xavier_uniform weights (stored as (in, out)), zero biases —
    mirrors `weights_init` applied to the three nn.Linear layers."""

    def xavier(k, fan_in, fan_out):
        bound = math.sqrt(6.0 / (fan_in + fan_out))
        return jax.random.uniform(k, (fan_in, fan_out), jnp.float32,
                                  -bound, bound)

    k1, k2, k3 = jax.random.split(key, 3)
    w1 = xavier(k1, n_feature, H1)
    b1 = jnp.zeros((H1,), jnp.float32)
    w2 = xavier(k2, H1, H2)
    b2 = jnp.zeros((H2,), jnp.float32)
    wc = xavier(k3, H2, 1)
    bc = jnp.zeros((1,), jnp.float32)
    return (w1, b1, w2, b2, wc, bc)


def scorer_reference(inputs, params, *, use_bf16=True):
    """Pure-JAX reference (eval path).  use_bf16=True mirrors the kernel's
    bf16-operand / f32-accumulate matmul numerics; False is the exact f32
    module semantics."""
    w1, b1, w2, b2, wc, bc = params
    T, B, C = inputs.shape
    x = inputs.reshape(-1, C)
    if use_bf16:
        h1 = jnp.dot(x.astype(jnp.bfloat16), w1.astype(jnp.bfloat16),
                     preferred_element_type=jnp.float32)
    else:
        h1 = x @ w1
    h1 = jnp.maximum(h1 + b1, 0.0)
    if use_bf16:
        h2 = jnp.dot(h1.astype(jnp.bfloat16), w2.astype(jnp.bfloat16),
                     preferred_element_type=jnp.float32)
    else:
        h2 = h1 @ w2
    h2 = jnp.maximum(h2 + b2, 0.0)
    s = jax.nn.sigmoid(h2 @ wc + bc)
    return s.reshape(T, B, 1)


if __name__ == "__main__":
    key = jax.random.PRNGKey(0)
    k_param, k_in = jax.random.split(key)

    T, B, C = 8, 2, N_FEATURE
    inputs = jax.random.normal(k_in, (T, B, C), dtype=jnp.float32)
    params = init_params(k_param, C)

    # Eval path — the only path model.forward exercises; deterministic.
    out = scorer_forward(inputs, params)
    out = jax.block_until_ready(out)
    assert out.shape == (T, B, 1), out.shape
    assert bool(jnp.all(jnp.isfinite(out)))

    # Tight check against a reference with matching bf16-matmul numerics
    # (tiny slack for the chunked f32 accumulation order).
    ref_bf16 = scorer_reference(inputs, params, use_bf16=True)
    np.testing.assert_allclose(np.asarray(out), np.asarray(ref_bf16),
                               rtol=2e-3, atol=2e-3)

    # Looser check against the exact f32 module semantics (bf16 cast error).
    ref_f32 = scorer_reference(inputs, params, use_bf16=False)
    np.testing.assert_allclose(np.asarray(out), np.asarray(ref_f32),
                               rtol=2.5e-2, atol=2.5e-2)

    print("KERNEL_OK")
</pallas_src>

<mosaic_0001>
module attributes {stable_mosaic.version = 11 : i64} {
  func.func @scorer_kernel(%arg0: i32, %arg1: memref<128x32xf32, #tpu.memory_space<vmem>>, %arg2: memref<32x1024xbf16, #tpu.memory_space<vmem>>, %arg3: memref<1x1024xf32, #tpu.memory_space<vmem>>, %arg4: memref<1024x128xbf16, #tpu.memory_space<vmem>>, %arg5: memref<1x128xf32, #tpu.memory_space<vmem>>, %arg6: memref<1x128xf32, #tpu.memory_space<vmem>>, %arg7: memref<1x1xf32, #tpu.memory_space<vmem>>, %arg8: memref<1x1x128xf32, #tpu.memory_space<vmem>>) attributes {dimension_semantics = [#tpu.dimension_semantics<parallel>], iteration_bounds = array<i64: 1>, scalar_prefetch = 0 : i64, scratch_operands = 0 : i64, tpu.core_type = #tpu.core_type<tc>, window_params = [{transform_indices = @transform_0, window_bounds = array<i64: 128, 32>}, {pipeline_mode = #tpu.pipeline_mode<synchronous>, transform_indices = @transform_1, window_bounds = array<i64: 32, 1024>}, {pipeline_mode = #tpu.pipeline_mode<synchronous>, transform_indices = @transform_2, window_bounds = array<i64: 1, 1024>}, {pipeline_mode = #tpu.pipeline_mode<synchronous>, transform_indices = @transform_3, window_bounds = array<i64: 1024, 128>}, {pipeline_mode = #tpu.pipeline_mode<synchronous>, transform_indices = @transform_4, window_bounds = array<i64: 1, 128>}, {pipeline_mode = #tpu.pipeline_mode<synchronous>, transform_indices = @transform_5, window_bounds = array<i64: 1, 128>}, {pipeline_mode = #tpu.pipeline_mode<synchronous>, transform_indices = @transform_6, window_bounds = array<i64: 1, 1>}, {transform_indices = @transform_7, window_bounds = array<i64: 1, 1, 128>}]} {
    %c0 = arith.constant 0 : index
    %c0_0 = arith.constant 0 : index
    %0 = vector.load %arg1[%c0, %c0_0] : memref<128x32xf32, #tpu.memory_space<vmem>>, vector<128x32xf32>
    %1 = arith.truncf %0 : vector<128x32xf32> to vector<128x32xbf16>
    %cst = arith.constant 0.000000e+00 : f32
    %2 = vector.broadcast %cst : f32 to vector<128x128xf32>
    %c0_i32 = arith.constant 0 : i32
    %c256_i32 = arith.constant 256 : i32
    %3 = arith.muli %c0_i32, %c256_i32 : i32
    %4 = tpu.assume_multiple %3, 256 : i32
    %c0_1 = arith.constant 0 : index
    %5 = arith.index_cast %4 : i32 to index
    %6 = vector.load %arg2[%c0_1, %5] : memref<32x1024xbf16, #tpu.memory_space<vmem>>, vector<32x256xbf16>
    %c0_2 = arith.constant 0 : index
    %7 = arith.index_cast %4 : i32 to index
    %8 = vector.load %arg3[%c0_2, %7] : memref<1x1024xf32, #tpu.memory_space<vmem>>, vector<1x256xf32>
    %cst_3 = arith.constant dense<0.000000e+00> : vector<128x256xf32>
    %9 = tpu.matmul %1, %6, %cst_3 {dimension_numbers = #tpu.dot_dimension_numbers<[1], [0], [0], [1], [0, 0, 1, 1], [], []>} : vector<128x32xbf16>, vector<32x256xbf16>, vector<128x256xf32> -> vector<128x256xf32>
    %10 = vector.broadcast %8 : vector<1x256xf32> to vector<128x256xf32>
    %11 = arith.addf %9, %10 : vector<128x256xf32>
    %cst_4 = arith.constant 0.000000e+00 : f32
    %12 = vector.broadcast %cst_4 : f32 to vector<128x256xf32>
    %13 = arith.maximumf %11, %12 : vector<128x256xf32>
    %14 = arith.index_cast %4 : i32 to index
    %c0_5 = arith.constant 0 : index
    %15 = vector.load %arg4[%14, %c0_5] : memref<1024x128xbf16, #tpu.memory_space<vmem>>, vector<256x128xbf16>
    %16 = arith.truncf %13 : vector<128x256xf32> to vector<128x256xbf16>
    %cst_6 = arith.constant dense<0.000000e+00> : vector<128x128xf32>
    %17 = tpu.matmul %16, %15, %cst_6 {dimension_numbers = #tpu.dot_dimension_numbers<[1], [0], [0], [1], [0, 0, 1, 1], [], []>} : vector<128x256xbf16>, vector<256x128xbf16>, vector<128x128xf32> -> vector<128x128xf32>
    %18 = arith.addf %2, %17 : vector<128x128xf32>
    %c1_i32 = arith.constant 1 : i32
    %c256_i32_7 = arith.constant 256 : i32
    %19 = arith.muli %c1_i32, %c256_i32_7 : i32
    %20 = tpu.assume_multiple %19, 256 : i32
    %c0_8 = arith.constant 0 : index
    %21 = arith.index_cast %20 : i32 to index
    %22 = vector.load %arg2[%c0_8, %21] : memref<32x1024xbf16, #tpu.memory_space<vmem>>, vector<32x256xbf16>
    %c0_9 = arith.constant 0 : index
    %23 = arith.index_cast %20 : i32 to index
    %24 = vector.load %arg3[%c0_9, %23] : memref<1x1024xf32, #tpu.memory_space<vmem>>, vector<1x256xf32>
    %cst_10 = arith.constant dense<0.000000e+00> : vector<128x256xf32>
    %25 = tpu.matmul %1, %22, %cst_10 {dimension_numbers = #tpu.dot_dimension_numbers<[1], [0], [0], [1], [0, 0, 1, 1], [], []>} : vector<128x32xbf16>, vector<32x256xbf16>, vector<128x256xf32> -> vector<128x256xf32>
    %26 = vector.broadcast %24 : vector<1x256xf32> to vector<128x256xf32>
    %27 = arith.addf %25, %26 : vector<128x256xf32>
    %cst_11 = arith.constant 0.000000e+00 : f32
    %28 = vector.broadcast %cst_11 : f32 to vector<128x256xf32>
    %29 = arith.maximumf %27, %28 : vector<128x256xf32>
    %30 = arith.index_cast %20 : i32 to index
    %c0_12 = arith.constant 0 : index
    %31 = vector.load %arg4[%30, %c0_12] : memref<1024x128xbf16, #tpu.memory_space<vmem>>, vector<256x128xbf16>
    %32 = arith.truncf %29 : vector<128x256xf32> to vector<128x256xbf16>
    %cst_13 = arith.constant dense<0.000000e+00> : vector<128x128xf32>
    %33 = tpu.matmul %32, %31, %cst_13 {dimension_numbers = #tpu.dot_dimension_numbers<[1], [0], [0], [1], [0, 0, 1, 1], [], []>} : vector<128x256xbf16>, vector<256x128xbf16>, vector<128x128xf32> -> vector<128x128xf32>
    %34 = arith.addf %18, %33 : vector<128x128xf32>
    %c2_i32 = arith.constant 2 : i32
    %c256_i32_14 = arith.constant 256 : i32
    %35 = arith.muli %c2_i32, %c256_i32_14 : i32
    %36 = tpu.assume_multiple %35, 256 : i32
    %c0_15 = arith.constant 0 : index
    %37 = arith.index_cast %36 : i32 to index
    %38 = vector.load %arg2[%c0_15, %37] : memref<32x1024xbf16, #tpu.memory_space<vmem>>, vector<32x256xbf16>
    %c0_16 = arith.constant 0 : index
    %39 = arith.index_cast %36 : i32 to index
    %40 = vector.load %arg3[%c0_16, %39] : memref<1x1024xf32, #tpu.memory_space<vmem>>, vector<1x256xf32>
    %cst_17 = arith.constant dense<0.000000e+00> : vector<128x256xf32>
    %41 = tpu.matmul %1, %38, %cst_17 {dimension_numbers = #tpu.dot_dimension_numbers<[1], [0], [0], [1], [0, 0, 1, 1], [], []>} : vector<128x32xbf16>, vector<32x256xbf16>, vector<128x256xf32> -> vector<128x256xf32>
    %42 = vector.broadcast %40 : vector<1x256xf32> to vector<128x256xf32>
    %43 = arith.addf %41, %42 : vector<128x256xf32>
    %cst_18 = arith.constant 0.000000e+00 : f32
    %44 = vector.broadcast %cst_18 : f32 to vector<128x256xf32>
    %45 = arith.maximumf %43, %44 : vector<128x256xf32>
    %46 = arith.index_cast %36 : i32 to index
    %c0_19 = arith.constant 0 : index
    %47 = vector.load %arg4[%46, %c0_19] : memref<1024x128xbf16, #tpu.memory_space<vmem>>, vector<256x128xbf16>
    %48 = arith.truncf %45 : vector<128x256xf32> to vector<128x256xbf16>
    %cst_20 = arith.constant dense<0.000000e+00> : vector<128x128xf32>
    %49 = tpu.matmul %48, %47, %cst_20 {dimension_numbers = #tpu.dot_dimension_numbers<[1], [0], [0], [1], [0, 0, 1, 1], [], []>} : vector<128x256xbf16>, vector<256x128xbf16>, vector<128x128xf32> -> vector<128x128xf32>
    %50 = arith.addf %34, %49 : vector<128x128xf32>
    %c3_i32 = arith.constant 3 : i32
    %c256_i32_21 = arith.constant 256 : i32
    %51 = arith.muli %c3_i32, %c256_i32_21 : i32
    %52 = tpu.assume_multiple %51, 256 : i32
    %c0_22 = arith.constant 0 : index
    %53 = arith.index_cast %52 : i32 to index
    %54 = vector.load %arg2[%c0_22, %53] : memref<32x1024xbf16, #tpu.memory_space<vmem>>, vector<32x256xbf16>
    %c0_23 = arith.constant 0 : index
    %55 = arith.index_cast %52 : i32 to index
    %56 = vector.load %arg3[%c0_23, %55] : memref<1x1024xf32, #tpu.memory_space<vmem>>, vector<1x256xf32>
    %cst_24 = arith.constant dense<0.000000e+00> : vector<128x256xf32>
    %57 = tpu.matmul %1, %54, %cst_24 {dimension_numbers = #tpu.dot_dimension_numbers<[1], [0], [0], [1], [0, 0, 1, 1], [], []>} : vector<128x32xbf16>, vector<32x256xbf16>, vector<128x256xf32> -> vector<128x256xf32>
    %58 = vector.broadcast %56 : vector<1x256xf32> to vector<128x256xf32>
    %59 = arith.addf %57, %58 : vector<128x256xf32>
    %cst_25 = arith.constant 0.000000e+00 : f32
    %60 = vector.broadcast %cst_25 : f32 to vector<128x256xf32>
    %61 = arith.maximumf %59, %60 : vector<128x256xf32>
    %62 = arith.index_cast %52 : i32 to index
    %c0_26 = arith.constant 0 : index
    %63 = vector.load %arg4[%62, %c0_26] : memref<1024x128xbf16, #tpu.memory_space<vmem>>, vector<256x128xbf16>
    %64 = arith.truncf %61 : vector<128x256xf32> to vector<128x256xbf16>
    %cst_27 = arith.constant dense<0.000000e+00> : vector<128x128xf32>
    %65 = tpu.matmul %64, %63, %cst_27 {dimension_numbers = #tpu.dot_dimension_numbers<[1], [0], [0], [1], [0, 0, 1, 1], [], []>} : vector<128x256xbf16>, vector<256x128xbf16>, vector<128x128xf32> -> vector<128x128xf32>
    %66 = arith.addf %50, %65 : vector<128x128xf32>
    %c4_i32 = arith.constant 4 : i32
    %c0_28 = arith.constant 0 : index
    %c0_29 = arith.constant 0 : index
    %67 = vector.load %arg5[%c0_28, %c0_29] : memref<1x128xf32, #tpu.memory_space<vmem>>, vector<1x128xf32>
    %68 = vector.broadcast %67 : vector<1x128xf32> to vector<128x128xf32>
    %69 = arith.addf %66, %68 : vector<128x128xf32>
    %cst_30 = arith.constant 0.000000e+00 : f32
    %70 = vector.broadcast %cst_30 : f32 to vector<128x128xf32>
    %71 = arith.maximumf %69, %70 : vector<128x128xf32>
    %c0_31 = arith.constant 0 : index
    %c0_32 = arith.constant 0 : index
    %72 = vector.load %arg6[%c0_31, %c0_32] : memref<1x128xf32, #tpu.memory_space<vmem>>, vector<1x128xf32>
    %73 = vector.broadcast %72 : vector<1x128xf32> to vector<128x128xf32>
    %74 = arith.mulf %71, %73 : vector<128x128xf32>
    %75 = tpu.transpose %74, [1, 0] : vector<128x128xf32> -> vector<128x128xf32>
    %cst_33 = arith.constant dense<0.000000e+00> : vector<128xf32>
    %76 = vector.multi_reduction <add>, %75, %cst_33 [0] : vector<128x128xf32> to vector<128xf32>
    %77 = vector.shape_cast %76 : vector<128xf32> to vector<1x128xf32>
    %c0_34 = arith.constant 0 : index
    %c0_35 = arith.constant 0 : index
    %78 = vector.load %arg7[%c0_34, %c0_35] : memref<1x1xf32, #tpu.memory_space<vmem>>, vector<1x1xf32>
    %79 = vector.broadcast %78 : vector<1x1xf32> to vector<1x128xf32>
    %80 = arith.addf %77, %79 : vector<1x128xf32>
    %81 = arith.negf %80 : vector<1x128xf32>
    %82 = math.exp %81 : vector<1x128xf32>
    %cst_36 = arith.constant 1.000000e+00 : f32
    %83 = vector.broadcast %cst_36 : f32 to vector<1x128xf32>
    %84 = arith.addf %83, %82 : vector<1x128xf32>
    %85 = arith.divf %83, %84 : vector<1x128xf32>
    %86 = vector.shape_cast %85 : vector<1x128xf32> to vector<1x1x128xf32>
    %c0_37 = arith.constant 0 : index
    %c0_38 = arith.constant 0 : index
    %c0_39 = arith.constant 0 : index
    %87 = vector.load %arg8[%c0_37, %c0_38, %c0_39] : memref<1x1x128xf32, #tpu.memory_space<vmem>>, vector<1x1x128xf32>
    tpu.vector_store %arg8[%c0_37, %c0_38, %c0_39], %86 {strides = array<i32>} : memref<1x1x128xf32, #tpu.memory_space<vmem>>, vector<1x1x128xf32>,
    return
  }
  func.func @transform_0(%arg0: i32) -> (i32, i32) {
    %c0_i32 = arith.constant 0 : i32
    %c0_i32_0 = arith.constant 0 : i32
    return %arg0, %c0_i32 : i32, i32
  }
  func.func @transform_1(%arg0: i32) -> (i32, i32) {
    %c0_i32 = arith.constant 0 : i32
    %c0_i32_0 = arith.constant 0 : i32
    %c0_i32_1 = arith.constant 0 : i32
    return %c0_i32, %c0_i32_0 : i32, i32
  }
  func.func @transform_2(%arg0: i32) -> (i32, i32) {
    %c0_i32 = arith.constant 0 : i32
    %c0_i32_0 = arith.constant 0 : i32
    %c0_i32_1 = arith.constant 0 : i32
    return %c0_i32, %c0_i32_0 : i32, i32
  }
  func.func @transform_3(%arg0: i32) -> (i32, i32) {
    %c0_i32 = arith.constant 0 : i32
    %c0_i32_0 = arith.constant 0 : i32
    %c0_i32_1 = arith.constant 0 : i32
    return %c0_i32, %c0_i32_0 : i32, i32
  }
  func.func @transform_4(%arg0: i32) -> (i32, i32) {
    %c0_i32 = arith.constant 0 : i32
    %c0_i32_0 = arith.constant 0 : i32
    %c0_i32_1 = arith.constant 0 : i32
    return %c0_i32, %c0_i32_0 : i32, i32
  }
  func.func @transform_5(%arg0: i32) -> (i32, i32) {
    %c0_i32 = arith.constant 0 : i32
    %c0_i32_0 = arith.constant 0 : i32
    %c0_i32_1 = arith.constant 0 : i32
    return %c0_i32, %c0_i32_0 : i32, i32
  }
  func.func @transform_6(%arg0: i32) -> (i32, i32) {
    %c0_i32 = arith.constant 0 : i32
    %c0_i32_0 = arith.constant 0 : i32
    %c0_i32_1 = arith.constant 0 : i32
    return %c0_i32, %c0_i32_0 : i32, i32
  }
  func.func @transform_7(%arg0: i32) -> (i32, i32, i32) {
    %c0_i32 = arith.constant 0 : i32
    %c0_i32_0 = arith.constant 0 : i32
    %c0_i32_1 = arith.constant 0 : i32
    return %arg0, %c0_i32, %c0_i32_0 : i32, i32, i32
  }
}

</mosaic_0001>

<llo_original>
// kernel: tpu_custom_call.1
$region0: #{tpu_custom_call.1}
  #allocation0 [shape = 'u32[]', space=smem, size = 0x4, offset = 0x4, fixed_abs, tag = 'smem constant byte address 0x4 - core index']
  #allocation1 [shape = 'u32[144,128]{1,0:T(1,128)}', space=vmem, size = 0x12000, scoped, tag = 'internal scratch']
  #allocation2 [shape = 'f32[1,1]{1,0:T(1,128)S(1)}', space=vmem, size = 0x200, scoped, tag = 'scoped memory for tpu_custom_call.1']
  %s0 = inlined_call_operand.vmem [shape: f32[128,32], index: 0, kind: input, shape index: {}]
  %s1 = inlined_call_operand.vmem [shape: bf16[32,1024], index: 1, kind: input, shape index: {}]
  %s2 = inlined_call_operand.vmem [shape: f32[1,1024], index: 2, kind: input, shape index: {}]
  %s3 = inlined_call_operand.hbm [shape: bf16[1024,128], index: 3, kind: input, shape index: {}]
  %s4 = inlined_call_operand.vmem [shape: f32[1,128], index: 4, kind: input, shape index: {}]
  %s5 = inlined_call_operand.vmem [shape: f32[1,128], index: 5, kind: input, shape index: {}]
  %s6 = inlined_call_operand.<no memory space> [shape: f32[1,1], index: 6, kind: input, shape index: {}]
  %s7 = inlined_call_operand.hbm [shape: f32[1,1,128], index: 7, kind: output, shape index: {}]
  %s8 = sld [smem:[#allocation0]]
  $region42: #{tpu_custom_call.1} parent=0
    _
  %s10 = ssub.s32 1, %s8
  %s11 = scalar_select 0, %s10, %s8
  %v12 = vstv %s6
  %13 = vst [vmem:[#allocation2] sm:$0x1] %v12
  $region1: #{tpu_custom_call.1} parent=0
    #allocation3 [shape = 'u8[262144]{0}', space=vmem, size = 0x40000, scoped, tag = 'input window, operand 3, single buffered']
    #allocation4 [shape = 's32[1]{0}', space=sflag, size = 0x4, scoped, tag = 'scoped memory for tpu_custom_call.1']
    #allocation5 [shape = 's32[1]{0}', space=sflag, size = 0x4, scoped, tag = 'scoped memory for tpu_custom_call.1']
    #allocation6 [shape = 'u8[512]{0}', space=vmem, size = 0x400, scoped, tag = 'output window, operand 0, single buffered']
    %14 = vsyncpa [#allocation4], 0
    %15 = vsyncpa [#allocation5], 0
    // Predicated region
    $region2: #{tpu_custom_call.1} parent=1 // pred_check
      _
    $region3: #{tpu_custom_call.1} parent=1 // pred_check_branch
      %17 = sbr.rel (0) target = $region5
    $region4: #{tpu_custom_call.1} parent=1 // pred_region
      _
    $region5: #{tpu_custom_call.1} parent=1 // pred_fallthru
      _
    // Predicated region
    $region6: #{tpu_custom_call.1} parent=1 // pred_check
      _
    $region7: #{tpu_custom_call.1} parent=1 // pred_check_branch
      %19 = sbr.rel (0) target = $region9
    $region8: #{tpu_custom_call.1} parent=1 // pred_region
      _
    $region9: #{tpu_custom_call.1} parent=1 // pred_fallthru
      _
    // Predicated region
    $region10: #{tpu_custom_call.1} parent=1 // pred_check
      _
    $region11: #{tpu_custom_call.1} parent=1 // pred_check_branch
      %21 = sbr.rel (0) target = $region13
    $region12: #{tpu_custom_call.1} parent=1 // pred_region
      _
    $region13: #{tpu_custom_call.1} parent=1 // pred_fallthru
      _
    // Predicated region
    $region14: #{tpu_custom_call.1} parent=1 // pred_check
      _
    $region15: #{tpu_custom_call.1} parent=1 // pred_check_branch
      %23 = sbr.rel (0) target = $region17
    $region16: #{tpu_custom_call.1} parent=1 // pred_region
      %s25 = ssub.s32 8192, 8192
      %26 = vsyncadd [#allocation4], %s25
      %s27 = sshll.u32 [#allocation3], 4
      %s28 = int_to_ptr.vmem [resolvable:$true] %s27
      %33 = dma.hbm_to_vmem [thread:$0]  %s3, 8192, %s28, [#allocation4], 64, 64, 4
    $region17: #{tpu_custom_call.1} parent=1 // pred_fallthru
      _
    // Predicated region
    $region18: #{tpu_custom_call.1} parent=1 // pred_check
      _
    $region19: #{tpu_custom_call.1} parent=1 // pred_check_branch
      %35 = sbr.rel (0) target = $region21
    $region20: #{tpu_custom_call.1} parent=1 // pred_region
      _
    $region21: #{tpu_custom_call.1} parent=1 // pred_fallthru
      _
    // Predicated region
    $region22: #{tpu_custom_call.1} parent=1 // pred_check
      _
    $region23: #{tpu_custom_call.1} parent=1 // pred_check_branch
      %37 = sbr.rel (0) target = $region25
    $region24: #{tpu_custom_call.1} parent=1 // pred_region
      _
    $region25: #{tpu_custom_call.1} parent=1 // pred_fallthru
      _
    // Predicated region
    $region26: #{tpu_custom_call.1} parent=1 // pred_check
      _
    $region27: #{tpu_custom_call.1} parent=1 // pred_check_branch
      %39 = sbr.rel (0) target = $region29
    $region28: #{tpu_custom_call.1} parent=1 // pred_region
      _
    $region29: #{tpu_custom_call.1} parent=1 // pred_fallthru
      _
    // Predicated region
    $region30: #{tpu_custom_call.1} parent=1 // pred_check
      _
    $region31: #{tpu_custom_call.1} parent=1 // pred_check_branch
      %41 = sbr.rel (0) target = $region33
    $region32: #{tpu_custom_call.1} parent=1 // pred_region
      %42 = dma.done [#allocation4], 8192
    $region33: #{tpu_custom_call.1} parent=1 // pred_fallthru
      _
    %v44 = vld [vmem:[%s0] sm:$0xff]
    %v45 = vld [vmem:[%s0 + $0x8] sm:$0xff]
    %v46 = vld [vmem:[%s0 + $0x10] sm:$0xff]
    %v47 = vld [vmem:[%s0 + $0x18] sm:$0xff]
    %v48 = vld [vmem:[%s0 + $0x20] sm:$0xff]
    %v49 = vld [vmem:[%s0 + $0x28] sm:$0xff]
    %v50 = vld [vmem:[%s0 + $0x30] sm:$0xff]
    %v51 = vld [vmem:[%s0 + $0x38] sm:$0xff]
    %v52 = vld [vmem:[%s0 + $0x40] sm:$0xff]
    %v53 = vld [vmem:[%s0 + $0x48] sm:$0xff]
    %v54 = vld [vmem:[%s0 + $0x50] sm:$0xff]
    %v55 = vld [vmem:[%s0 + $0x58] sm:$0xff]
    %v56 = vld [vmem:[%s0 + $0x60] sm:$0xff]
    %v57 = vld [vmem:[%s0 + $0x68] sm:$0xff]
    %v58 = vld [vmem:[%s0 + $0x70] sm:$0xff]
    %v59 = vld [vmem:[%s0 + $0x78] sm:$0xff]
    %v60 = vpack.c.bf16 %v45, %v44
    %v61 = vpack.c.bf16 %v47, %v46
    %v62 = vpack.c.bf16 %v49, %v48
    %v63 = vpack.c.bf16 %v51, %v50
    %v64 = vpack.c.bf16 %v53, %v52
    %v65 = vpack.c.bf16 %v55, %v54
    %v66 = vpack.c.bf16 %v57, %v56
    %v67 = vpack.c.bf16 %v59, %v58
    %v68 = vld [vmem:[%s1] sm:$0xff]
    %v69 = vld [vmem:[%s1 + $0x20] sm:$0xff]
    %v70 = vld [vmem:[%s1 + $0x40] sm:$0xff]
    %v71 = vld [vmem:[%s1 + $0x60] sm:$0xff]
    %v72 = vld [vmem:[%s2] sm:$0x3]
    %v74 = vlaneseq
    %v75 = vshrl.u32 %v74, 7
    %v76 = vsub.s32 0, %v75
    %v77 = vrot.slane %v72, %v76
    %v78 = vlaneseq
    %v79 = vshrl.u32 %v78, 7
    %v80 = vsub.s32 1, %v79
    %v81 = vrot.slane %v72, %v80
    %v88 = vunpack.c.l.b16 %v68
    %v89 = vunpack.c.h.b16 %v68
    %v90 = vunpack.c.l.b16 %v69
    %v91 = vunpack.c.h.b16 %v69
    %v92 = vunpack.c.l.b16 %v70
    %v93 = vunpack.c.h.b16 %v70
    %v94 = vunpack.c.l.b16 %v71
    %v95 = vunpack.c.h.b16 %v71
    %v96 = vpack.c.b16 %v90, %v88
    %v97 = vpack.c.b16 %v91, %v89
    %v98 = vpack.c.b16 %v94, %v92
    %v99 = vpack.c.b16 %v95, %v93
    %vm104 = vcmask 261120
    %v106 = vsel %vm104, %v60, 0
    %v109 = vsel %vm104, %v61, 0
    %v112 = vsel %vm104, %v62, 0
    %v115 = vsel %vm104, %v63, 0
    %v118 = vsel %vm104, %v64, 0
    %v121 = vsel %vm104, %v65, 0
    %v124 = vsel %vm104, %v66, 0
    %v127 = vsel %vm104, %v67, 0
    %129 = vmatprep.subr.bf16.mxu0 %v97
    %130 = vmatpush1.bf16.msra.mxu0 %v96
    %131 = vmatprep.subr.bf16.mxu0 %v99
    %132 = vmatpush1.bf16.msra.mxu0 %v98
    %133 = vmatprep.subr.bf16.mxu0 0
    %134 = vmatpush1.bf16.msra.mxu0 0
    %135 = vmatprep.subr.bf16.mxu0 0
    %136 = vmatpush1.bf16.msra.mxu0 0
    %137 = vmatprep.subr.bf16.mxu0 0
    %138 = vmatpush1.bf16.msra.mxu0 0
    %139 = vmatprep.subr.bf16.mxu0 0
    %140 = vmatpush1.bf16.msra.mxu0 0
    %141 = vmatprep.subr.bf16.mxu0 0
    %142 = vmatpush1.bf16.msra.mxu0 0
    %143 = vmatprep.subr.bf16.mxu0 0
    %144 = vmatpush1.bf16.msra.mxu0 0
    %145 = vmatprep.subr.bf16.mxu0 0
    %146 = vmatpush1.bf16.msra.mxu0 0
    %147 = vmatprep.subr.bf16.mxu0 0
    %148 = vmatpush1.bf16.msra.mxu0 0
    %149 = vmatprep.subr.bf16.mxu0 0
    %150 = vmatpush1.bf16.msra.mxu0 0
    %151 = vmatprep.subr.bf16.mxu0 0
    %152 = vmatpush1.bf16.msra.mxu0 0
    %153 = vmatprep.subr.bf16.mxu0 0
    %154 = vmatpush1.bf16.msra.mxu0 0
    %155 = vmatprep.subr.bf16.mxu0 0
    %156 = vmatpush1.bf16.msra.mxu0 0
    %157 = vmatprep.subr.bf16.mxu0 0
    %158 = vmatpush1.bf16.msra.mxu0 0
    %159 = vmatprep.subr.bf16.mxu0 0
    %160 = vmatpush1.bf16.msra.mxu0 0
    %161 = vmatprep.mubr.bf16.mxu0 0
    %162 = vmatmul.mubr.bf16.gmra.mrb[0].mxu0 %v106
    %v163 = vpop.f32.mrb[0].mxu0
    %v164 = vadd.f32 %v77, %v163
    %v165 = vpop.f32.mrb[0].mxu0
    %v166 = vadd.f32 %v81, %v165
    %v167 = vpop.f32.mrb[0].mxu0
    %v168 = vadd.f32 %v77, %v167
    %v169 = vpop.f32.mrb[0].mxu0
    %v170 = vadd.f32 %v81, %v169
    %171 = vmatprep.mubr.bf16.mxu0 0
    %172 = vmatmul.mubr.bf16.gmra.mrb[0].mxu0 %v109
    %v173 = vpop.f32.mrb[0].mxu0
    %v174 = vadd.f32 %v77, %v173
    %v175 = vpop.f32.mrb[0].mxu0
    %v176 = vadd.f32 %v81, %v175
    %v177 = vpop.f32.mrb[0].mxu0
    %v178 = vadd.f32 %v77, %v177
    %v179 = vpop.f32.mrb[0].mxu0
    %v180 = vadd.f32 %v81, %v179
    %181 = vmatprep.mubr.bf16.mxu0 0
    %182 = vmatmul.mubr.bf16.gmra.mrb[0].mxu0 %v112
    %v183 = vpop.f32.mrb[0].mxu0
    %v184 = vadd.f32 %v77, %v183
    %v185 = vpop.f32.mrb[0].mxu0
    %v186 = vadd.f32 %v81, %v185
    %v187 = vpop.f32.mrb[0].mxu0
    %v188 = vadd.f32 %v77, %v187
    %v189 = vpop.f32.mrb[0].mxu0
    %v190 = vadd.f32 %v81, %v189
    %191 = vmatprep.mubr.bf16.mxu0 0
    %192 = vmatmul.mubr.bf16.gmra.mrb[0].mxu0 %v115
    %v193 = vpop.f32.mrb[0].mxu0
    %v194 = vadd.f32 %v77, %v193
    %v195 = vpop.f32.mrb[0].mxu0
    %v196 = vadd.f32 %v81, %v195
    %v197 = vpop.f32.mrb[0].mxu0
    %v198 = vadd.f32 %v77, %v197
    %v199 = vpop.f32.mrb[0].mxu0
    %v200 = vadd.f32 %v81, %v199
    %201 = vmatprep.mubr.bf16.mxu0 0
    %202 = vmatmul.mubr.bf16.gmra.mrb[0].mxu0 %v118
    %v203 = vpop.f32.mrb[0].mxu0
    %v204 = vadd.f32 %v77, %v203
    %v205 = vpop.f32.mrb[0].mxu0
    %v206 = vadd.f32 %v81, %v205
    %v207 = vpop.f32.mrb[0].mxu0
    %v208 = vadd.f32 %v77, %v207
    %v209 = vpop.f32.mrb[0].mxu0
    %v210 = vadd.f32 %v81, %v209
    %211 = vmatprep.mubr.bf16.mxu0 0
    %212 = vmatmul.mubr.bf16.gmra.mrb[0].mxu0 %v121
    %v213 = vpop.f32.mrb[0].mxu0
    %v214 = vadd.f32 %v77, %v213
    %v215 = vpop.f32.mrb[0].mxu0
    %v216 = vadd.f32 %v81, %v215
    %v217 = vpop.f32.mrb[0].mxu0
    %v218 = vadd.f32 %v77, %v217
    %v219 = vpop.f32.mrb[0].mxu0
    %v220 = vadd.f32 %v81, %v219
    %221 = vmatprep.mubr.bf16.mxu0 0
    %222 = vmatmul.mubr.bf16.gmra.mrb[0].mxu0 %v124
    %v223 = vpop.f32.mrb[0].mxu0
    %v224 = vadd.f32 %v77, %v223
    %v225 = vpop.f32.mrb[0].mxu0
    %v226 = vadd.f32 %v81, %v225
    %v227 = vpop.f32.mrb[0].mxu0
    %v228 = vadd.f32 %v77, %v227
    %v229 = vpop.f32.mrb[0].mxu0
    %v230 = vadd.f32 %v81, %v229
    %231 = vmatprep.mubr.bf16.mxu0 0
    %232 = vmatmul.mubr.bf16.gmra.mrb[0].mxu0 %v127
    %v233 = vpop.f32.mrb[0].mxu0
    %v234 = vadd.f32 %v77, %v233
    %v235 = vpop.f32.mrb[0].mxu0
    %v236 = vadd.f32 %v81, %v235
    %v237 = vpop.f32.mrb[0].mxu0
    %v238 = vadd.f32 %v77, %v237
    %v239 = vpop.f32.mrb[0].mxu0
    %v240 = vadd.f32 %v81, %v239
    %241 = vdwg.mxu0
    %v242 = vmax.f32 %v164, 0.0
    %v243 = vmax.f32 %v166, 0.0
    %v244 = vmax.f32 %v168, 0.0
    %v245 = vmax.f32 %v170, 0.0
    %v246 = vmax.f32 %v174, 0.0
    %v247 = vmax.f32 %v176, 0.0
    %v248 = vmax.f32 %v178, 0.0
    %v249 = vmax.f32 %v180, 0.0
    %v250 = vmax.f32 %v184, 0.0
    %v251 = vmax.f32 %v186, 0.0
    %v252 = vmax.f32 %v188, 0.0
    %v253 = vmax.f32 %v190, 0.0
    %v254 = vmax.f32 %v194, 0.0
    %v255 = vmax.f32 %v196, 0.0
    %v256 = vmax.f32 %v198, 0.0
    %v257 = vmax.f32 %v200, 0.0
    %v258 = vmax.f32 %v204, 0.0
    %v259 = vmax.f32 %v206, 0.0
    %v260 = vmax.f32 %v208, 0.0
    %v261 = vmax.f32 %v210, 0.0
    %v262 = vmax.f32 %v214, 0.0
    %v263 = vmax.f32 %v216, 0.0
    %v264 = vmax.f32 %v218, 0.0
    %v265 = vmax.f32 %v220, 0.0
    %v266 = vmax.f32 %v224, 0.0
    %v267 = vmax.f32 %v226, 0.0
    %v268 = vmax.f32 %v228, 0.0
    %v269 = vmax.f32 %v230, 0.0
    %v270 = vmax.f32 %v234, 0.0
    %v271 = vmax.f32 %v236, 0.0
    %v272 = vmax.f32 %v238, 0.0
    %v273 = vmax.f32 %v240, 0.0
    %v274 = vld [vmem:[#allocation3] sm:$0xf]
    %v275 = vld [vmem:[#allocation3 + $0x4] sm:$0xf]
    %v276 = vld [vmem:[#allocation3 + $0x8] sm:$0xf]
    %v277 = vld [vmem:[#allocation3 + $0xc] sm:$0xf]
    %v278 = vld [vmem:[#allocation3 + $0x10] sm:$0xf]
    %v279 = vld [vmem:[#allocation3 + $0x14] sm:$0xf]
    %v280 = vld [vmem:[#allocation3 + $0x18] sm:$0xf]
    %v281 = vld [vmem:[#allocation3 + $0x1c] sm:$0xf]
    %v282 = vld [vmem:[#allocation3 + $0x20] sm:$0xf]
    %v283 = vld [vmem:[#allocation3 + $0x24] sm:$0xf]
    %v284 = vld [vmem:[#allocation3 + $0x28] sm:$0xf]
    %v285 = vld [vmem:[#allocation3 + $0x2c] sm:$0xf]
    %v286 = vld [vmem:[#allocation3 + $0x30] sm:$0xf]
    %v287 = vld [vmem:[#allocation3 + $0x34] sm:$0xf]
    %v288 = vld [vmem:[#allocation3 + $0x38] sm:$0xf]
    %v289 = vld [vmem:[#allocation3 + $0x3c] sm:$0xf]
    %v290 = vld [vmem:[#allocation3 + $0x40] sm:$0xf]
    %v291 = vld [vmem:[#allocation3 + $0x44] sm:$0xf]
    %v292 = vld [vmem:[#allocation3 + $0x48] sm:$0xf]
    %v293 = vld [vmem:[#allocation3 + $0x4c] sm:$0xf]
    %v294 = vld [vmem:[#allocation3 + $0x50] sm:$0xf]
    %v295 = vld [vmem:[#allocation3 + $0x54] sm:$0xf]
    %v296 = vld [vmem:[#allocation3 + $0x58] sm:$0xf]
    %v297 = vld [vmem:[#allocation3 + $0x5c] sm:$0xf]
    %v298 = vld [vmem:[#allocation3 + $0x60] sm:$0xf]
    %v299 = vld [vmem:[#allocation3 + $0x64] sm:$0xf]
    %v300 = vld [vmem:[#allocation3 + $0x68] sm:$0xf]
    %v301 = vld [vmem:[#allocation3 + $0x6c] sm:$0xf]
    %v302 = vld [vmem:[#allocation3 + $0x70] sm:$0xf]
    %v303 = vld [vmem:[#allocation3 + $0x74] sm:$0xf]
    %v304 = vld [vmem:[#allocation3 + $0x78] sm:$0xf]
    %v305 = vld [vmem:[#allocation3 + $0x7c] sm:$0xf]
    %v306 = vpack.c.bf16 %v244, %v242
    %v307 = vpack.c.bf16 %v245, %v243
    %v308 = vpack.c.bf16 %v248, %v246
    %v309 = vpack.c.bf16 %v249, %v247
    %v310 = vpack.c.bf16 %v252, %v250
    %v311 = vpack.c.bf16 %v253, %v251
    %v312 = vpack.c.bf16 %v256, %v254
    %v313 = vpack.c.bf16 %v257, %v255
    %v314 = vpack.c.bf16 %v260, %v258
    %v315 = vpack.c.bf16 %v261, %v259
    %v316 = vpack.c.bf16 %v264, %v262
    %v317 = vpack.c.bf16 %v265, %v263
    %v318 = vpack.c.bf16 %v268, %v266
    %v319 = vpack.c.bf16 %v269, %v267
    %v320 = vpack.c.bf16 %v272, %v270
    %v321 = vpack.c.bf16 %v273, %v271
    %s322 = scalar_lea.vmem %s1, 8
    %v323 = vld [vmem:[%s322] sm:$0xff]
    %v324 = vld [vmem:[%s322 + $0x20] sm:$0xff]
    %v325 = vld [vmem:[%s322 + $0x40] sm:$0xff]
    %v326 = vld [vmem:[%s322 + $0x60] sm:$0xff]
    %s327 = scalar_lea.vmem %s2, 2
    %v328 = vld [vmem:[%s327] sm:$0x3]
    %v330 = vlaneseq
    %v331 = vshrl.u32 %v330, 7
    %v332 = vsub.s32 0, %v331
    %v333 = vrot.slane %v328, %v332
    %v334 = vlaneseq
    %v335 = vshrl.u32 %v334, 7
    %v336 = vsub.s32 1, %v335
    %v337 = vrot.slane %v328, %v336
    %v344 = vunpack.c.l.b16 %v323
    %v345 = vunpack.c.h.b16 %v323
    %v346 = vunpack.c.l.b16 %v324
    %v347 = vunpack.c.h.b16 %v324
    %v348 = vunpack.c.l.b16 %v325
    %v349 = vunpack.c.h.b16 %v325
    %v350 = vunpack.c.l.b16 %v326
    %v351 = vunpack.c.h.b16 %v326
    %v352 = vpack.c.b16 %v346, %v344
    %v353 = vpack.c.b16 %v347, %v345
    %v354 = vpack.c.b16 %v350, %v348
    %v355 = vpack.c.b16 %v351, %v349
    %360 = vmatprep.subr.bf16.mxu0 %v353
    %361 = vmatpush1.bf16.msra.mxu0 %v352
    %362 = vmatprep.subr.bf16.mxu0 %v355
    %363 = vmatpush1.bf16.msra.mxu0 %v354
    %364 = vmatprep.subr.bf16.mxu0 0
    %365 = vmatpush1.bf16.msra.mxu0 0
    %366 = vmatprep.subr.bf16.mxu0 0
    %367 = vmatpush1.bf16.msra.mxu0 0
    %368 = vmatprep.subr.bf16.mxu0 0
    %369 = vmatpush1.bf16.msra.mxu0 0
    %370 = vmatprep.subr.bf16.mxu0 0
    %371 = vmatpush1.bf16.msra.mxu0 0
    %372 = vmatprep.subr.bf16.mxu0 0
    %373 = vmatpush1.bf16.msra.mxu0 0
    %374 = vmatprep.subr.bf16.mxu0 0
    %375 = vmatpush1.bf16.msra.mxu0 0
    %376 = vmatprep.subr.bf16.mxu0 0
    %377 = vmatpush1.bf16.msra.mxu0 0
    %378 = vmatprep.subr.bf16.mxu0 0
    %379 = vmatpush1.bf16.msra.mxu0 0
    %380 = vmatprep.subr.bf16.mxu0 0
    %381 = vmatpush1.bf16.msra.mxu0 0
    %382 = vmatprep.subr.bf16.mxu0 0
    %383 = vmatpush1.bf16.msra.mxu0 0
    %384 = vmatprep.subr.bf16.mxu0 0
    %385 = vmatpush1.bf16.msra.mxu0 0
    %386 = vmatprep.subr.bf16.mxu0 0
    %387 = vmatpush1.bf16.msra.mxu0 0
    %388 = vmatprep.subr.bf16.mxu0 0
    %389 = vmatpush1.bf16.msra.mxu0 0
    %390 = vmatprep.subr.bf16.mxu0 0
    %391 = vmatpush1.bf16.msra.mxu0 0
    %392 = vmatprep.mubr.bf16.mxu0 0
    %393 = vmatmul.mubr.bf16.gmra.mrb[0].mxu0 %v106
    %v394 = vpop.f32.mrb[0].mxu0
    %v395 = vadd.f32 %v333, %v394
    %v396 = vpop.f32.mrb[0].mxu0
    %v397 = vadd.f32 %v337, %v396
    %v398 = vpop.f32.mrb[0].mxu0
    %v399 = vadd.f32 %v333, %v398
    %v400 = vpop.f32.mrb[0].mxu0
    %v401 = vadd.f32 %v337, %v400
    %402 = vmatprep.mubr.bf16.mxu0 0
    %403 = vmatmul.mubr.bf16.gmra.mrb[0].mxu0 %v109
    %v404 = vpop.f32.mrb[0].mxu0
    %v405 = vadd.f32 %v333, %v404
    %v406 = vpop.f32.mrb[0].mxu0
    %v407 = vadd.f32 %v337, %v406
    %v408 = vpop.f32.mrb[0].mxu0
    %v409 = vadd.f32 %v333, %v408
    %v410 = vpop.f32.mrb[0].mxu0
    %v411 = vadd.f32 %v337, %v410
    %412 = vmatprep.mubr.bf16.mxu0 0
    %413 = vmatmul.mubr.bf16.gmra.mrb[0].mxu0 %v112
    %v414 = vpop.f32.mrb[0].mxu0
    %v415 = vadd.f32 %v333, %v414
    %v416 = vpop.f32.mrb[0].mxu0
    %v417 = vadd.f32 %v337, %v416
    %v418 = vpop.f32.mrb[0].mxu0
    %v419 = vadd.f32 %v333, %v418
    %v420 = vpop.f32.mrb[0].mxu0
    %v421 = vadd.f32 %v337, %v420
    %422 = vmatprep.mubr.bf16.mxu0 0
    %423 = vmatmul.mubr.bf16.gmra.mrb[0].mxu0 %v115
    %v424 = vpop.f32.mrb[0].mxu0
    %v425 = vadd.f32 %v333, %v424
    %v426 = vpop.f32.mrb[0].mxu0
    %v427 = vadd.f32 %v337, %v426
    %v428 = vpop.f32.mrb[0].mxu0
    %v429 = vadd.f32 %v333, %v428
    %v430 = vpop.f32.mrb[0].mxu0
    %v431 = vadd.f32 %v337, %v430
    %432 = vmatprep.mubr.bf16.mxu0 0
    %433 = vmatmul.mubr.bf16.gmra.mrb[0].mxu0 %v118
    %v434 = vpop.f32.mrb[0].mxu0
    %v435 = vadd.f32 %v333, %v434
    %v436 = vpop.f32.mrb[0].mxu0
    %v437 = vadd.f32 %v337, %v436
    %v438 = vpop.f32.mrb[0].mxu0
    %v439 = vadd.f32 %v333, %v438
    %v440 = vpop.f32.mrb[0].mxu0
    %v441 = vadd.f32 %v337, %v440
    %442 = vmatprep.mubr.bf16.mxu0 0
    %443 = vmatmul.mubr.bf16.gmra.mrb[0].mxu0 %v121
    %v444 = vpop.f32.mrb[0].mxu0
    %v445 = vadd.f32 %v333, %v444
    %v446 = vpop.f32.mrb[0].mxu0
    %v447 = vadd.f32 %v337, %v446
    %v448 = vpop.f32.mrb[0].mxu0
    %v449 = vadd.f32 %v333, %v448
    %v450 = vpop.f32.mrb[0].mxu0
    %v451 = vadd.f32 %v337, %v450
    %452 = vmatprep.mubr.bf16.mxu0 0
    %453 = vmatmul.mubr.bf16.gmra.mrb[0].mxu0 %v124
    %v454 = vpop.f32.mrb[0].mxu0
    %v455 = vadd.f32 %v333, %v454
    %v456 = vpop.f32.mrb[0].mxu0
    %v457 = vadd.f32 %v337, %v456
    %v458 = vpop.f32.mrb[0].mxu0
    %v459 = vadd.f32 %v333, %v458
    %v460 = vpop.f32.mrb[0].mxu0
    %v461 = vadd.f32 %v337, %v460
    %462 = vmatprep.mubr.bf16.mxu0 0
    %463 = vmatmul.mubr.bf16.gmra.mrb[0].mxu0 %v127
    %v464 = vpop.f32.mrb[0].mxu0
    %v465 = vadd.f32 %v333, %v464
    %v466 = vpop.f32.mrb[0].mxu0
    %v467 = vadd.f32 %v337, %v466
    %v468 = vpop.f32.mrb[0].mxu0
    %v469 = vadd.f32 %v333, %v468
    %v470 = vpop.f32.mrb[0].mxu0
    %v471 = vadd.f32 %v337, %v470
    %472 = vdwg.mxu0
    %v473 = vmax.f32 %v395, 0.0
    %v474 = vmax.f32 %v397, 0.0
    %v475 = vmax.f32 %v399, 0.0
    %v476 = vmax.f32 %v401, 0.0
    %v477 = vmax.f32 %v405, 0.0
    %v478 = vmax.f32 %v407, 0.0
    %v479 = vmax.f32 %v409, 0.0
    %v480 = vmax.f32 %v411, 0.0
    %v481 = vmax.f32 %v415, 0.0
    %v482 = vmax.f32 %v417, 0.0
    %v483 = vmax.f32 %v419, 0.0
    %v484 = vmax.f32 %v421, 0.0
    %v485 = vmax.f32 %v425, 0.0
    %v486 = vmax.f32 %v427, 0.0
    %v487 = vmax.f32 %v429, 0.0
    %v488 = vmax.f32 %v431, 0.0
    %v489 = vmax.f32 %v435, 0.0
    %v490 = vmax.f32 %v437, 0.0
    %v491 = vmax.f32 %v439, 0.0
    %v492 = vmax.f32 %v441, 0.0
    %v493 = vmax.f32 %v445, 0.0
    %v494 = vmax.f32 %v447, 0.0
    %v495 = vmax.f32 %v449, 0.0
    %v496 = vmax.f32 %v451, 0.0
    %v497 = vmax.f32 %v455, 0.0
    %v498 = vmax.f32 %v457, 0.0
    %v499 = vmax.f32 %v459, 0.0
    %v500 = vmax.f32 %v461, 0.0
    %v501 = vmax.f32 %v465, 0.0
    %v502 = vmax.f32 %v467, 0.0
    %v503 = vmax.f32 %v469, 0.0
    %v504 = vmax.f32 %v471, 0.0
    %s505 = scalar_lea.vmem [#allocation3], 128
    %v506 = vld [vmem:[%s505] sm:$0xf]
    %v507 = vld [vmem:[%s505 + $0x4] sm:$0xf]
    %v508 = vld [vmem:[%s505 + $0x8] sm:$0xf]
    %v509 = vld [vmem:[%s505 + $0xc] sm:$0xf]
    %v510 = vld [vmem:[%s505 + $0x10] sm:$0xf]
    %v511 = vld [vmem:[%s505 + $0x14] sm:$0xf]
    %v512 = vld [vmem:[%s505 + $0x18] sm:$0xf]
    %v513 = vld [vmem:[%s505 + $0x1c] sm:$0xf]
    %v514 = vld [vmem:[%s505 + $0x20] sm:$0xf]
    %v515 = vld [vmem:[%s505 + $0x24] sm:$0xf]
    %v516 = vld [vmem:[%s505 + $0x28] sm:$0xf]
    %v517 = vld [vmem:[%s505 + $0x2c] sm:$0xf]
    %v518 = vld [vmem:[%s505 + $0x30] sm:$0xf]
    %v519 = vld [vmem:[%s505 + $0x34] sm:$0xf]
    %v520 = vld [vmem:[%s505 + $0x38] sm:$0xf]
    %v521 = vld [vmem:[%s505 + $0x3c] sm:$0xf]
    %v522 = vld [vmem:[%s505 + $0x40] sm:$0xf]
    %v523 = vld [vmem:[%s505 + $0x44] sm:$0xf]
    %v524 = vld [vmem:[%s505 + $0x48] sm:$0xf]
    %v525 = vld [vmem:[%s505 + $0x4c] sm:$0xf]
    %v526 = vld [vmem:[%s505 + $0x50] sm:$0xf]
    %v527 = vld [vmem:[%s505 + $0x54] sm:$0xf]
    %v528 = vld [vmem:[%s505 + $0x58] sm:$0xf]
    %v529 = vld [vmem:[%s505 + $0x5c] sm:$0xf]
    %v530 = vld [vmem:[%s505 + $0x60] sm:$0xf]
    %v531 = vld [vmem:[%s505 + $0x64] sm:$0xf]
    %v532 = vld [vmem:[%s505 + $0x68] sm:$0xf]
    %v533 = vld [vmem:[%s505 + $0x6c] sm:$0xf]
    %v534 = vld [vmem:[%s505 + $0x70] sm:$0xf]
    %v535 = vld [vmem:[%s505 + $0x74] sm:$0xf]
    %v536 = vld [vmem:[%s505 + $0x78] sm:$0xf]
    %v537 = vld [vmem:[%s505 + $0x7c] sm:$0xf]
    %v538 = vpack.c.bf16 %v475, %v473
    %v539 = vpack.c.bf16 %v476, %v474
    %v540 = vpack.c.bf16 %v479, %v477
    %v541 = vpack.c.bf16 %v480, %v478
    %v542 = vpack.c.bf16 %v483, %v481
    %v543 = vpack.c.bf16 %v484, %v482
    %v544 = vpack.c.bf16 %v487, %v485
    %v545 = vpack.c.bf16 %v488, %v486
    %v546 = vpack.c.bf16 %v491, %v489
    %v547 = vpack.c.bf16 %v492, %v490
    %v548 = vpack.c.bf16 %v495, %v493
    %v549 = vpack.c.bf16 %v496, %v494
    %v550 = vpack.c.bf16 %v499, %v497
    %v551 = vpack.c.bf16 %v500, %v498
    %v552 = vpack.c.bf16 %v503, %v501
    %v553 = vpack.c.bf16 %v504, %v502
    %v586 = vunpack.c.l.b16 %v506
    %v587 = vunpack.c.l.b16 %v507
    %v588 = vunpack.c.l.b16 %v508
    %v589 = vunpack.c.l.b16 %v509
    %v590 = vunpack.c.l.b16 %v510
    %v591 = vunpack.c.l.b16 %v511
    %v592 = vunpack.c.l.b16 %v512
    %v593 = vunpack.c.l.b16 %v513
    %v594 = vunpack.c.l.b16 %v514
    %v595 = vunpack.c.l.b16 %v515
    %v596 = vunpack.c.l.b16 %v516
    %v597 = vunpack.c.l.b16 %v517
    %v598 = vunpack.c.l.b16 %v518
    %v599 = vunpack.c.l.b16 %v519
    %v600 = vunpack.c.l.b16 %v520
    %v601 = vunpack.c.l.b16 %v521
    %v602 = vunpack.c.l.b16 %v522
    %v603 = vunpack.c.l.b16 %v523
    %v604 = vunpack.c.l.b16 %v524
    %v605 = vunpack.c.l.b16 %v525
    %v606 = vunpack.c.l.b16 %v526
    %v607 = vunpack.c.l.b16 %v527
    %v608 = vunpack.c.l.b16 %v528
    %v609 = vunpack.c.l.b16 %v529
    %v610 = vunpack.c.l.b16 %v530
    %v611 = vunpack.c.l.b16 %v531
    %v612 = vunpack.c.l.b16 %v532
    %v613 = vunpack.c.l.b16 %v533
    %v614 = vunpack.c.l.b16 %v534
    %v615 = vunpack.c.l.b16 %v535
    %v616 = vunpack.c.l.b16 %v536
    %v617 = vunpack.c.l.b16 %v537
    %v618 = vpack.c.b16 %v587, %v586
    %v619 = vpack.c.b16 %v589, %v588
    %v620 = vpack.c.b16 %v591, %v590
    %v621 = vpack.c.b16 %v593, %v592
    %v622 = vpack.c.b16 %v595, %v594
    %v623 = vpack.c.b16 %v597, %v596
    %v624 = vpack.c.b16 %v599, %v598
    %v625 = vpack.c.b16 %v601, %v600
    %v626 = vpack.c.b16 %v603, %v602
    %v627 = vpack.c.b16 %v605, %v604
    %v628 = vpack.c.b16 %v607, %v606
    %v629 = vpack.c.b16 %v609, %v608
    %v630 = vpack.c.b16 %v611, %v610
    %v631 = vpack.c.b16 %v613, %v612
    %v632 = vpack.c.b16 %v615, %v614
    %v633 = vpack.c.b16 %v617, %v616
    %650 = vmatprep.subr.bf16.mxu0 0
    %651 = vmatpush1.bf16.msra.mxu0 %v618
    %652 = vmatprep.subr.bf16.mxu0 0
    %653 = vmatpush1.bf16.msra.mxu0 %v619
    %654 = vmatprep.subr.bf16.mxu0 0
    %655 = vmatpush1.bf16.msra.mxu0 %v620
    %656 = vmatprep.subr.bf16.mxu0 0
    %657 = vmatpush1.bf16.msra.mxu0 %v621
    %658 = vmatprep.subr.bf16.mxu0 0
    %659 = vmatpush1.bf16.msra.mxu0 %v622
    %660 = vmatprep.subr.bf16.mxu0 0
    %661 = vmatpush1.bf16.msra.mxu0 %v623
    %662 = vmatprep.subr.bf16.mxu0 0
    %663 = vmatpush1.bf16.msra.mxu0 %v624
    %664 = vmatprep.subr.bf16.mxu0 0
    %665 = vmatpush1.bf16.msra.mxu0 %v625
    %666 = vmatprep.subr.bf16.mxu0 0
    %667 = vmatpush1.bf16.msra.mxu0 %v626
    %668 = vmatprep.subr.bf16.mxu0 0
    %669 = vmatpush1.bf16.msra.mxu0 %v627
    %670 = vmatprep.subr.bf16.mxu0 0
    %671 = vmatpush1.bf16.msra.mxu0 %v628
    %672 = vmatprep.subr.bf16.mxu0 0
    %673 = vmatpush1.bf16.msra.mxu0 %v629
    %674 = vmatprep.subr.bf16.mxu0 0
    %675 = vmatpush1.bf16.msra.mxu0 %v630
    %676 = vmatprep.subr.bf16.mxu0 0
    %677 = vmatpush1.bf16.msra.mxu0 %v631
    %678 = vmatprep.subr.bf16.mxu0 0
    %679 = vmatpush1.bf16.msra.mxu0 %v632
    %680 = vmatprep.subr.bf16.mxu0 0
    %681 = vmatpush1.bf16.msra.mxu0 %v633
    %682 = vmatprep.mubr.bf16.mxu0 %v539
    %683 = vmatmul.mubr.bf16.gmra.mrb[0].mxu0 %v538
    %v684 = vpop.f32.mrb[0].mxu0
    %v685 = vadd.f32 0.0, %v684
    %v686 = vpop.f32.mrb[0].mxu0
    %v687 = vpop.f32.mrb[0].mxu0
    %v688 = vadd.f32 0.0, %v687
    %v689 = vpop.f32.mrb[0].mxu0
    %690 = vmatprep.mubr.bf16.mxu0 %v541
    %691 = vmatmul.mubr.bf16.gmra.mrb[0].mxu0 %v540
    %v692 = vpop.f32.mrb[0].mxu0
    %v693 = vadd.f32 0.0, %v692
    %v694 = vpop.f32.mrb[0].mxu0
    %v695 = vpop.f32.mrb[0].mxu0
    %v696 = vadd.f32 0.0, %v695
    %v697 = vpop.f32.mrb[0].mxu0
    %698 = vmatprep.mubr.bf16.mxu0 %v543
    %699 = vmatmul.mubr.bf16.gmra.mrb[0].mxu0 %v542
    %v700 = vpop.f32.mrb[0].mxu0
    %v701 = vadd.f32 0.0, %v700
    %v702 = vpop.f32.mrb[0].mxu0
    %v703 = vpop.f32.mrb[0].mxu0
    %v704 = vadd.f32 0.0, %v703
    %v705 = vpop.f32.mrb[0].mxu0
    %706 = vmatprep.mubr.bf16.mxu0 %v545
    %707 = vmatmul.mubr.bf16.gmra.mrb[0].mxu0 %v544
    %v708 = vpop.f32.mrb[0].mxu0
    %v709 = vadd.f32 0.0, %v708
    %v710 = vpop.f32.mrb[0].mxu0
    %v711 = vpop.f32.mrb[0].mxu0
    %v712 = vadd.f32 0.0, %v711
    %v713 = vpop.f32.mrb[0].mxu0
    %714 = vmatprep.mubr.bf16.mxu0 %v547
    %715 = vmatmul.mubr.bf16.gmra.mrb[0].mxu0 %v546
    %v716 = vpop.f32.mrb[0].mxu0
    %v717 = vadd.f32 0.0, %v716
    %v718 = vpop.f32.mrb[0].mxu0
    %v719 = vpop.f32.mrb[0].mxu0
    %v720 = vadd.f32 0.0, %v719
    %v721 = vpop.f32.mrb[0].mxu0
    %722 = vmatprep.mubr.bf16.mxu0 %v549
    %723 = vmatmul.mubr.bf16.gmra.mrb[0].mxu0 %v548
    %v724 = vpop.f32.mrb[0].mxu0
    %v725 = vadd.f32 0.0, %v724
    %v726 = vpop.f32.mrb[0].mxu0
    %v727 = vpop.f32.mrb[0].mxu0
    %v728 = vadd.f32 0.0, %v727
    %v729 = vpop.f32.mrb[0].mxu0
    %730 = vmatprep.mubr.bf16.mxu0 %v551
    %731 = vmatmul.mubr.bf16.gmra.mrb[0].mxu0 %v550
    %v732 = vpop.f32.mrb[0].mxu0
    %v733 = vadd.f32 0.0, %v732
    %v734 = vpop.f32.mrb[0].mxu0
    %v735 = vpop.f32.mrb[0].mxu0
    %v736 = vadd.f32 0.0, %v735
    %v737 = vpop.f32.mrb[0].mxu0
    %738 = vmatprep.mubr.bf16.mxu0 %v553
    %739 = vmatmul.mubr.bf16.gmra.mrb[0].mxu0 %v552
    %v740 = vpop.f32.mrb[0].mxu0
    %v741 = vadd.f32 0.0, %v740
    %v742 = vpop.f32.mrb[0].mxu0
    %v743 = vpop.f32.mrb[0].mxu0
    %v744 = vadd.f32 0.0, %v743
    %v745 = vpop.f32.mrb[0].mxu0
    %746 = vdwg.mxu0
    %v779 = vunpack.c.l.b16 %v274
    %v780 = vunpack.c.l.b16 %v275
    %v781 = vunpack.c.l.b16 %v276
    %v782 = vunpack.c.l.b16 %v277
    %v783 = vunpack.c.l.b16 %v278
    %v784 = vunpack.c.l.b16 %v279
    %v785 = vunpack.c.l.b16 %v280
    %v786 = vunpack.c.l.b16 %v281
    %v787 = vunpack.c.l.b16 %v282
    %v788 = vunpack.c.l.b16 %v283
    %v789 = vunpack.c.l.b16 %v284
    %v790 = vunpack.c.l.b16 %v285
    %v791 = vunpack.c.l.b16 %v286
    %v792 = vunpack.c.l.b16 %v287
    %v793 = vunpack.c.l.b16 %v288
    %v794 = vunpack.c.l.b16 %v289
    %v795 = vunpack.c.l.b16 %v290
    %v796 = vunpack.c.l.b16 %v291
    %v797 = vunpack.c.l.b16 %v292
    %v798 = vunpack.c.l.b16 %v293
    %v799 = vunpack.c.l.b16 %v294
    %v800 = vunpack.c.l.b16 %v295
    %v801 = vunpack.c.l.b16 %v296
    %v802 = vunpack.c.l.b16 %v297
    %v803 = vunpack.c.l.b16 %v298
    %v804 = vunpack.c.l.b16 %v299
    %v805 = vunpack.c.l.b16 %v300
    %v806 = vunpack.c.l.b16 %v301
    %v807 = vunpack.c.l.b16 %v302
    %v808 = vunpack.c.l.b16 %v303
    %v809 = vunpack.c.l.b16 %v304
    %v810 = vunpack.c.l.b16 %v305
    %v811 = vpack.c.b16 %v780, %v779
    %v812 = vpack.c.b16 %v782, %v781
    %v813 = vpack.c.b16 %v784, %v783
    %v814 = vpack.c.b16 %v786, %v785
    %v815 = vpack.c.b16 %v788, %v787
    %v816 = vpack.c.b16 %v790, %v789
    %v817 = vpack.c.b16 %v792, %v791
    %v818 = vpack.c.b16 %v794, %v793
    %v819 = vpack.c.b16 %v796, %v795
    %v820 = vpack.c.b16 %v798, %v797
    %v821 = vpack.c.b16 %v800, %v799
    %v822 = vpack.c.b16 %v802, %v801
    %v823 = vpack.c.b16 %v804, %v803
    %v824 = vpack.c.b16 %v806, %v805
    %v825 = vpack.c.b16 %v808, %v807
    %v826 = vpack.c.b16 %v810, %v809
    %843 = vmatprep.subr.bf16.mxu0 0
    %844 = vmatpush1.bf16.msra.mxu0 %v811
    %845 = vmatprep.subr.bf16.mxu0 0
    %846 = vmatpush1.bf16.msra.mxu0 %v812
    %847 = vmatprep.subr.bf16.mxu0 0
    %848 = vmatpush1.bf16.msra.mxu0 %v813
    %849 = vmatprep.subr.bf16.mxu0 0
    %850 = vmatpush1.bf16.msra.mxu0 %v814
    %851 = vmatprep.subr.bf16.mxu0 0
    %852 = vmatpush1.bf16.msra.mxu0 %v815
    %853 = vmatprep.subr.bf16.mxu0 0
    %854 = vmatpush1.bf16.msra.mxu0 %v816
    %855 = vmatprep.subr.bf16.mxu0 0
    %856 = vmatpush1.bf16.msra.mxu0 %v817
    %857 = vmatprep.subr.bf16.mxu0 0
    %858 = vmatpush1.bf16.msra.mxu0 %v818
    %859 = vmatprep.subr.bf16.mxu0 0
    %860 = vmatpush1.bf16.msra.mxu0 %v819
    %861 = vmatprep.subr.bf16.mxu0 0
    %862 = vmatpush1.bf16.msra.mxu0 %v820
    %863 = vmatprep.subr.bf16.mxu0 0
    %864 = vmatpush1.bf16.msra.mxu0 %v821
    %865 = vmatprep.subr.bf16.mxu0 0
    %866 = vmatpush1.bf16.msra.mxu0 %v822
    %867 = vmatprep.subr.bf16.mxu0 0
    %868 = vmatpush1.bf16.msra.mxu0 %v823
    %869 = vmatprep.subr.bf16.mxu0 0
    %870 = vmatpush1.bf16.msra.mxu0 %v824
    %871 = vmatprep.subr.bf16.mxu0 0
    %872 = vmatpush1.bf16.msra.mxu0 %v825
    %873 = vmatprep.subr.bf16.mxu0 0
    %874 = vmatpush1.bf16.msra.mxu0 %v826
    %875 = vmatprep.mubr.bf16.mxu0 %v307
    %876 = vmatmul.mubr.bf16.gmra.mrb[0].mxu0 %v306
    %v877 = vpop.f32.mrb[0].mxu0
    %v878 = vadd.f32 %v685, %v877
    %v879 = vpop.f32.mrb[0].mxu0
    %v880 = vpop.f32.mrb[0].mxu0
    %v881 = vadd.f32 %v688, %v880
    %v882 = vpop.f32.mrb[0].mxu0
    %883 = vmatprep.mubr.bf16.mxu0 %v309
    %884 = vmatmul.mubr.bf16.gmra.mrb[0].mxu0 %v308
    %v885 = vpop.f32.mrb[0].mxu0
    %v886 = vadd.f32 %v693, %v885
    %v887 = vpop.f32.mrb[0].mxu0
    %v888 = vpop.f32.mrb[0].mxu0
    %v889 = vadd.f32 %v696, %v888
    %v890 = vpop.f32.mrb[0].mxu0
    %891 = vmatprep.mubr.bf16.mxu0 %v311
    %892 = vmatmul.mubr.bf16.gmra.mrb[0].mxu0 %v310
    %v893 = vpop.f32.mrb[0].mxu0
    %v894 = vadd.f32 %v701, %v893
    %v895 = vpop.f32.mrb[0].mxu0
    %v896 = vpop.f32.mrb[0].mxu0
    %v897 = vadd.f32 %v704, %v896
    %v898 = vpop.f32.mrb[0].mxu0
    %899 = vmatprep.mubr.bf16.mxu0 %v313
    %900 = vmatmul.mubr.bf16.gmra.mrb[0].mxu0 %v312
    %v901 = vpop.f32.mrb[0].mxu0
    %v902 = vadd.f32 %v709, %v901
    %v903 = vpop.f32.mrb[0].mxu0
    %v904 = vpop.f32.mrb[0].mxu0
    %v905 = vadd.f32 %v712, %v904
    %v906 = vpop.f32.mrb[0].mxu0
    %907 = vmatprep.mubr.bf16.mxu0 %v315
    %908 = vmatmul.mubr.bf16.gmra.mrb[0].mxu0 %v314
    %v909 = vpop.f32.mrb[0].mxu0
    %v910 = vadd.f32 %v717, %v909
    %v911 = vpop.f32.mrb[0].mxu0
    %v912 = vpop.f32.mrb[0].mxu0
    %v913 = vadd.f32 %v720, %v912
    %v914 = vpop.f32.mrb[0].mxu0
    %915 = vmatprep.mubr.bf16.mxu0 %v317
    %916 = vmatmul.mubr.bf16.gmra.mrb[0].mxu0 %v316
    %v917 = vpop.f32.mrb[0].mxu0
    %v918 = vadd.f32 %v725, %v917
    %v919 = vpop.f32.mrb[0].mxu0
    %v920 = vpop.f32.mrb[0].mxu0
    %v921 = vadd.f32 %v728, %v920
    %v922 = vpop.f32.mrb[0].mxu0
    %923 = vmatprep.mubr.bf16.mxu0 %v319
    %924 = vmatmul.mubr.bf16.gmra.mrb[0].mxu0 %v318
    %v925 = vpop.f32.mrb[0].mxu0
    %v926 = vadd.f32 %v733, %v925
    %v927 = vpop.f32.mrb[0].mxu0
    %v928 = vpop.f32.mrb[0].mxu0
    %v929 = vadd.f32 %v736, %v928
    %v930 = vpop.f32.mrb[0].mxu0
    %931 = vmatprep.mubr.bf16.mxu0 %v321
    %932 = vmatmul.mubr.bf16.gmra.mrb[0].mxu0 %v320
    %v933 = vpop.f32.mrb[0].mxu0
    %v934 = vadd.f32 %v741, %v933
    %v935 = vpop.f32.mrb[0].mxu0
    %v936 = vpop.f32.mrb[0].mxu0
    %v937 = vadd.f32 %v744, %v936
    %v938 = vpop.f32.mrb[0].mxu0
    %939 = vdwg.mxu0
    %s940 = scalar_lea.vmem %s1, 16
    %v941 = vld [vmem:[%s940] sm:$0xff]
    %v942 = vld [vmem:[%s940 + $0x20] sm:$0xff]
    %v943 = vld [vmem:[%s940 + $0x40] sm:$0xff]
    %v944 = vld [vmem:[%s940 + $0x60] sm:$0xff]
    %s945 = scalar_lea.vmem %s2, 4
    %v946 = vld [vmem:[%s945] sm:$0x3]
    %v948 = vlaneseq
    %v949 = vshrl.u32 %v948, 7
    %v950 = vsub.s32 0, %v949
    %v951 = vrot.slane %v946, %v950
    %v952 = vlaneseq
    %v953 = vshrl.u32 %v952, 7
    %v954 = vsub.s32 1, %v953
    %v955 = vrot.slane %v946, %v954
    %v962 = vunpack.c.l.b16 %v941
    %v963 = vunpack.c.h.b16 %v941
    %v964 = vunpack.c.l.b16 %v942
    %v965 = vunpack.c.h.b16 %v942
    %v966 = vunpack.c.l.b16 %v943
    %v967 = vunpack.c.h.b16 %v943
    %v968 = vunpack.c.l.b16 %v944
    %v969 = vunpack.c.h.b16 %v944
    %v970 = vpack.c.b16 %v964, %v962
    %v971 = vpack.c.b16 %v965, %v963
    %v972 = vpack.c.b16 %v968, %v966
    %v973 = vpack.c.b16 %v969, %v967
    %978 = vmatprep.subr.bf16.mxu0 %v971
    %979 = vmatpush1.bf16.msra.mxu0 %v970
    %980 = vmatprep.subr.bf16.mxu0 %v973
    %981 = vmatpush1.bf16.msra.mxu0 %v972
    %982 = vmatprep.subr.bf16.mxu0 0
    %983 = vmatpush1.bf16.msra.mxu0 0
    %984 = vmatprep.subr.bf16.mxu0 0
    %985 = vmatpush1.bf16.msra.mxu0 0
    %986 = vmatprep.subr.bf16.mxu0 0
    %987 = vmatpush1.bf16.msra.mxu0 0
    %988 = vmatprep.subr.bf16.mxu0 0
    %989 = vmatpush1.bf16.msra.mxu0 0
    %990 = vmatprep.subr.bf16.mxu0 0
    %991 = vmatpush1.bf16.msra.mxu0 0
    %992 = vmatprep.subr.bf16.mxu0 0
    %993 = vmatpush1.bf16.msra.mxu0 0
    %994 = vmatprep.subr.bf16.mxu0 0
    %995 = vmatpush1.bf16.msra.mxu0 0
    %996 = vmatprep.subr.bf16.mxu0 0
    %997 = vmatpush1.bf16.msra.mxu0 0
    %998 = vmatprep.subr.bf16.mxu0 0
    %999 = vmatpush1.bf16.msra.mxu0 0
    %1000 = vmatprep.subr.bf16.mxu0 0
    %1001 = vmatpush1.bf16.msra.mxu0 0
    %1002 = vmatprep.subr.bf16.mxu0 0
    %1003 = vmatpush1.bf16.msra.mxu0 0
    %1004 = vmatprep.subr.bf16.mxu0 0
    %1005 = vmatpush1.bf16.msra.mxu0 0
    %1006 = vmatprep.subr.bf16.mxu0 0
    %1007 = vmatpush1.bf16.msra.mxu0 0
    %1008 = vmatprep.subr.bf16.mxu0 0
    %1009 = vmatpush1.bf16.msra.mxu0 0
    %1010 = vmatprep.mubr.bf16.mxu0 0
    %1011 = vmatmul.mubr.bf16.gmra.mrb[0].mxu0 %v106
    %v1012 = vpop.f32.mrb[0].mxu0
    %v1013 = vadd.f32 %v951, %v1012
    %v1014 = vpop.f32.mrb[0].mxu0
    %v1015 = vadd.f32 %v955, %v1014
    %v1016 = vpop.f32.mrb[0].mxu0
    %v1017 = vadd.f32 %v951, %v1016
    %v1018 = vpop.f32.mrb[0].mxu0
    %v1019 = vadd.f32 %v955, %v1018
    %1020 = vmatprep.mubr.bf16.mxu0 0
    %1021 = vmatmul.mubr.bf16.gmra.mrb[0].mxu0 %v109
    %v1022 = vpop.f32.mrb[0].mxu0
    %v1023 = vadd.f32 %v951, %v1022
    %v1024 = vpop.f32.mrb[0].mxu0
    %v1025 = vadd.f32 %v955, %v1024
    %v1026 = vpop.f32.mrb[0].mxu0
    %v1027 = vadd.f32 %v951, %v1026
    %v1028 = vpop.f32.mrb[0].mxu0
    %v1029 = vadd.f32 %v955, %v1028
    %1030 = vmatprep.mubr.bf16.mxu0 0
    %1031 = vmatmul.mubr.bf16.gmra.mrb[0].mxu0 %v112
    %v1032 = vpop.f32.mrb[0].mxu0
    %v1033 = vadd.f32 %v951, %v1032
    %v1034 = vpop.f32.mrb[0].mxu0
    %v1035 = vadd.f32 %v955, %v1034
    %v1036 = vpop.f32.mrb[0].mxu0
    %v1037 = vadd.f32 %v951, %v1036
    %v1038 = vpop.f32.mrb[0].mxu0
    %v1039 = vadd.f32 %v955, %v1038
    %1040 = vmatprep.mubr.bf16.mxu0 0
    %1041 = vmatmul.mubr.bf16.gmra.mrb[0].mxu0 %v115
    %v1042 = vpop.f32.mrb[0].mxu0
    %v1043 = vadd.f32 %v951, %v1042
    %v1044 = vpop.f32.mrb[0].mxu0
    %v1045 = vadd.f32 %v955, %v1044
    %v1046 = vpop.f32.mrb[0].mxu0
    %v1047 = vadd.f32 %v951, %v1046
    %v1048 = vpop.f32.mrb[0].mxu0
    %v1049 = vadd.f32 %v955, %v1048
    %1050 = vmatprep.mubr.bf16.mxu0 0
    %1051 = vmatmul.mubr.bf16.gmra.mrb[0].mxu0 %v118
    %v1052 = vpop.f32.mrb[0].mxu0
    %v1053 = vadd.f32 %v951, %v1052
    %v1054 = vpop.f32.mrb[0].mxu0
    %v1055 = vadd.f32 %v955, %v1054
    %v1056 = vpop.f32.mrb[0].mxu0
    %v1057 = vadd.f32 %v951, %v1056
    %v1058 = vpop.f32.mrb[0].mxu0
    %v1059 = vadd.f32 %v955, %v1058
    %1060 = vmatprep.mubr.bf16.mxu0 0
    %1061 = vmatmul.mubr.bf16.gmra.mrb[0].mxu0 %v121
    %v1062 = vpop.f32.mrb[0].mxu0
    %v1063 = vadd.f32 %v951, %v1062
    %v1064 = vpop.f32.mrb[0].mxu0
    %v1065 = vadd.f32 %v955, %v1064
    %v1066 = vpop.f32.mrb[0].mxu0
    %v1067 = vadd.f32 %v951, %v1066
    %v1068 = vpop.f32.mrb[0].mxu0
    %v1069 = vadd.f32 %v955, %v1068
    %1070 = vmatprep.mubr.bf16.mxu0 0
    %1071 = vmatmul.mubr.bf16.gmra.mrb[0].mxu0 %v124
    %v1072 = vpop.f32.mrb[0].mxu0
    %v1073 = vadd.f32 %v951, %v1072
    %v1074 = vpop.f32.mrb[0].mxu0
    %v1075 = vadd.f32 %v955, %v1074
    %v1076 = vpop.f32.mrb[0].mxu0
    %v1077 = vadd.f32 %v951, %v1076
    %v1078 = vpop.f32.mrb[0].mxu0
    %v1079 = vadd.f32 %v955, %v1078
    %1080 = vmatprep.mubr.bf16.mxu0 0
    %1081 = vmatmul.mubr.bf16.gmra.mrb[0].mxu0 %v127
    %v1082 = vpop.f32.mrb[0].mxu0
    %v1083 = vadd.f32 %v951, %v1082
    %v1084 = vpop.f32.mrb[0].mxu0
    %v1085 = vadd.f32 %v955, %v1084
    %v1086 = vpop.f32.mrb[0].mxu0
    %v1087 = vadd.f32 %v951, %v1086
    %v1088 = vpop.f32.mrb[0].mxu0
    %v1089 = vadd.f32 %v955, %v1088
    %1090 = vdwg.mxu0
    %v1091 = vmax.f32 %v1013, 0.0
    %v1092 = vmax.f32 %v1015, 0.0
    %v1093 = vmax.f32 %v1017, 0.0
    %v1094 = vmax.f32 %v1019, 0.0
    %v1095 = vmax.f32 %v1023, 0.0
    %v1096 = vmax.f32 %v1025, 0.0
    %v1097 = vmax.f32 %v1027, 0.0
    %v1098 = vmax.f32 %v1029, 0.0
    %v1099 = vmax.f32 %v1033, 0.0
    %v1100 = vmax.f32 %v1035, 0.0
    %v1101 = vmax.f32 %v1037, 0.0
    %v1102 = vmax.f32 %v1039, 0.0
    %v1103 = vmax.f32 %v1043, 0.0
    %v1104 = vmax.f32 %v1045, 0.0
    %v1105 = vmax.f32 %v1047, 0.0
    %v1106 = vmax.f32 %v1049, 0.0
    %v1107 = vmax.f32 %v1053, 0.0
    %v1108 = vmax.f32 %v1055, 0.0
    %v1109 = vmax.f32 %v1057, 0.0
    %v1110 = vmax.f32 %v1059, 0.0
    %v1111 = vmax.f32 %v1063, 0.0
    %v1112 = vmax.f32 %v1065, 0.0
    %v1113 = vmax.f32 %v1067, 0.0
    %v1114 = vmax.f32 %v1069, 0.0
    %v1115 = vmax.f32 %v1073, 0.0
    %v1116 = vmax.f32 %v1075, 0.0
    %v1117 = vmax.f32 %v1077, 0.0
    %v1118 = vmax.f32 %v1079, 0.0
    %v1119 = vmax.f32 %v1083, 0.0
    %v1120 = vmax.f32 %v1085, 0.0
    %v1121 = vmax.f32 %v1087, 0.0
    %v1122 = vmax.f32 %v1089, 0.0
    %s1123 = scalar_lea.vmem [#allocation3], 256
    %v1124 = vld [vmem:[%s1123] sm:$0xf]
    %v1125 = vld [vmem:[%s1123 + $0x4] sm:$0xf]
    %v1126 = vld [vmem:[%s1123 + $0x8] sm:$0xf]
    %v1127 = vld [vmem:[%s1123 + $0xc] sm:$0xf]
    %v1128 = vld [vmem:[%s1123 + $0x10] sm:$0xf]
    %v1129 = vld [vmem:[%s1123 + $0x14] sm:$0xf]
    %v1130 = vld [vmem:[%s1123 + $0x18] sm:$0xf]
    %v1131 = vld [vmem:[%s1123 + $0x1c] sm:$0xf]
    %v1132 = vld [vmem:[%s1123 + $0x20] sm:$0xf]
    %v1133 = vld [vmem:[%s1123 + $0x24] sm:$0xf]
    %v1134 = vld [vmem:[%s1123 + $0x28] sm:$0xf]
    %v1135 = vld [vmem:[%s1123 + $0x2c] sm:$0xf]
    %v1136 = vld [vmem:[%s1123 + $0x30] sm:$0xf]
    %v1137 = vld [vmem:[%s1123 + $0x34] sm:$0xf]
    %v1138 = vld [vmem:[%s1123 + $0x38] sm:$0xf]
    %v1139 = vld [vmem:[%s1123 + $0x3c] sm:$0xf]
    %v1140 = vld [vmem:[%s1123 + $0x40] sm:$0xf]
    %v1141 = vld [vmem:[%s1123 + $0x44] sm:$0xf]
    %v1142 = vld [vmem:[%s1123 + $0x48] sm:$0xf]
    %v1143 = vld [vmem:[%s1123 + $0x4c] sm:$0xf]
    %v1144 = vld [vmem:[%s1123 + $0x50] sm:$0xf]
    %v1145 = vld [vmem:[%s1123 + $0x54] sm:$0xf]
    %v1146 = vld [vmem:[%s1123 + $0x58] sm:$0xf]
    %v1147 = vld [vmem:[%s1123 + $0x5c] sm:$0xf]
    %v1148 = vld [vmem:[%s1123 + $0x60] sm:$0xf]
    %v1149 = vld [vmem:[%s1123 + $0x64] sm:$0xf]
    %v1150 = vld [vmem:[%s1123 + $0x68] sm:$0xf]
    %v1151 = vld [vmem:[%s1123 + $0x6c] sm:$0xf]
    %v1152 = vld [vmem:[%s1123 + $0x70] sm:$0xf]
    %v1153 = vld [vmem:[%s1123 + $0x74] sm:$0xf]
    %v1154 = vld [vmem:[%s1123 + $0x78] sm:$0xf]
    %v1155 = vld [vmem:[%s1123 + $0x7c] sm:$0xf]
    %v1156 = vpack.c.bf16 %v1093, %v1091
    %v1157 = vpack.c.bf16 %v1094, %v1092
    %v1158 = vpack.c.bf16 %v1097, %v1095
    %v1159 = vpack.c.bf16 %v1098, %v1096
    %v1160 = vpack.c.bf16 %v1101, %v1099
    %v1161 = vpack.c.bf16 %v1102, %v1100
    %v1162 = vpack.c.bf16 %v1105, %v1103
    %v1163 = vpack.c.bf16 %v1106, %v1104
    %v1164 = vpack.c.bf16 %v1109, %v1107
    %v1165 = vpack.c.bf16 %v1110, %v1108
    %v1166 = vpack.c.bf16 %v1113, %v1111
    %v1167 = vpack.c.bf16 %v1114, %v1112
    %v1168 = vpack.c.bf16 %v1117, %v1115
    %v1169 = vpack.c.bf16 %v1118, %v1116
    %v1170 = vpack.c.bf16 %v1121, %v1119
    %v1171 = vpack.c.bf16 %v1122, %v1120
    %v1204 = vunpack.c.l.b16 %v1124
    %v1205 = vunpack.c.l.b16 %v1125
    %v1206 = vunpack.c.l.b16 %v1126
    %v1207 = vunpack.c.l.b16 %v1127
    %v1208 = vunpack.c.l.b16 %v1128
    %v1209 = vunpack.c.l.b16 %v1129
    %v1210 = vunpack.c.l.b16 %v1130
    %v1211 = vunpack.c.l.b16 %v1131
    %v1212 = vunpack.c.l.b16 %v1132
    %v1213 = vunpack.c.l.b16 %v1133
    %v1214 = vunpack.c.l.b16 %v1134
    %v1215 = vunpack.c.l.b16 %v1135
    %v1216 = vunpack.c.l.b16 %v1136
    %v1217 = vunpack.c.l.b16 %v1137
    %v1218 = vunpack.c.l.b16 %v1138
    %v1219 = vunpack.c.l.b16 %v1139
    %v1220 = vunpack.c.l.b16 %v1140
    %v1221 = vunpack.c.l.b16 %v1141
    %v1222 = vunpack.c.l.b16 %v1142
    %v1223 = vunpack.c.l.b16 %v1143
    %v1224 = vunpack.c.l.b16 %v1144
    %v1225 = vunpack.c.l.b16 %v1145
    %v1226 = vunpack.c.l.b16 %v1146
    %v1227 = vunpack.c.l.b16 %v1147
    %v1228 = vunpack.c.l.b16 %v1148
    %v1229 = vunpack.c.l.b16 %v1149
    %v1230 = vunpack.c.l.b16 %v1150
    %v1231 = vunpack.c.l.b16 %v1151
    %v1232 = vunpack.c.l.b16 %v1152
    %v1233 = vunpack.c.l.b16 %v1153
    %v1234 = vunpack.c.l.b16 %v1154
    %v1235 = vunpack.c.l.b16 %v1155
    %v1236 = vpack.c.b16 %v1205, %v1204
    %v1237 = vpack.c.b16 %v1207, %v1206
    %v1238 = vpack.c.b16 %v1209, %v1208
    %v1239 = vpack.c.b16 %v1211, %v1210
    %v1240 = vpack.c.b16 %v1213, %v1212
    %v1241 = vpack.c.b16 %v1215, %v1214
    %v1242 = vpack.c.b16 %v1217, %v1216
    %v1243 = vpack.c.b16 %v1219, %v1218
    %v1244 = vpack.c.b16 %v1221, %v1220
    %v1245 = vpack.c.b16 %v1223, %v1222
    %v1246 = vpack.c.b16 %v1225, %v1224
    %v1247 = vpack.c.b16 %v1227, %v1226
    %v1248 = vpack.c.b16 %v1229, %v1228
    %v1249 = vpack.c.b16 %v1231, %v1230
    %v1250 = vpack.c.b16 %v1233, %v1232
    %v1251 = vpack.c.b16 %v1235, %v1234
    %1268 = vmatprep.subr.bf16.mxu0 0
    %1269 = vmatpush1.bf16.msra.mxu0 %v1236
    %1270 = vmatprep.subr.bf16.mxu0 0
    %1271 = vmatpush1.bf16.msra.mxu0 %v1237
    %1272 = vmatprep.subr.bf16.mxu0 0
    %1273 = vmatpush1.bf16.msra.mxu0 %v1238
    %1274 = vmatprep.subr.bf16.mxu0 0
    %1275 = vmatpush1.bf16.msra.mxu0 %v1239
    %1276 = vmatprep.subr.bf16.mxu0 0
    %1277 = vmatpush1.bf16.msra.mxu0 %v1240
    %1278 = vmatprep.subr.bf16.mxu0 0
    %1279 = vmatpush1.bf16.msra.mxu0 %v1241
    %1280 = vmatprep.subr.bf16.mxu0 0
    %1281 = vmatpush1.bf16.msra.mxu0 %v1242
    %1282 = vmatprep.subr.bf16.mxu0 0
    %1283 = vmatpush1.bf16.msra.mxu0 %v1243
    %1284 = vmatprep.subr.bf16.mxu0 0
    %1285 = vmatpush1.bf16.msra.mxu0 %v1244
    %1286 = vmatprep.subr.bf16.mxu0 0
    %1287 = vmatpush1.bf16.msra.mxu0 %v1245
    %1288 = vmatprep.subr.bf16.mxu0 0
    %1289 = vmatpush1.bf16.msra.mxu0 %v1246
    %1290 = vmatprep.subr.bf16.mxu0 0
    %1291 = vmatpush1.bf16.msra.mxu0 %v1247
    %1292 = vmatprep.subr.bf16.mxu0 0
    %1293 = vmatpush1.bf16.msra.mxu0 %v1248
    %1294 = vmatprep.subr.bf16.mxu0 0
    %1295 = vmatpush1.bf16.msra.mxu0 %v1249
    %1296 = vmatprep.subr.bf16.mxu0 0
    %1297 = vmatpush1.bf16.msra.mxu0 %v1250
    %1298 = vmatprep.subr.bf16.mxu0 0
    %1299 = vmatpush1.bf16.msra.mxu0 %v1251
    %1300 = vmatprep.mubr.bf16.mxu0 %v1157
    %1301 = vmatmul.mubr.bf16.gmra.mrb[0].mxu0 %v1156
    %v1302 = vpop.f32.mrb[0].mxu0
    %v1303 = vadd.f32 0.0, %v1302
    %v1304 = vpop.f32.mrb[0].mxu0
    %v1305 = vpop.f32.mrb[0].mxu0
    %v1306 = vadd.f32 0.0, %v1305
    %v1307 = vpop.f32.mrb[0].mxu0
    %1308 = vmatprep.mubr.bf16.mxu0 %v1159
    %1309 = vmatmul.mubr.bf16.gmra.mrb[0].mxu0 %v1158
    %v1310 = vpop.f32.mrb[0].mxu0
    %v1311 = vadd.f32 0.0, %v1310
    %v1312 = vpop.f32.mrb[0].mxu0
    %v1313 = vpop.f32.mrb[0].mxu0
    %v1314 = vadd.f32 0.0, %v1313
    %v1315 = vpop.f32.mrb[0].mxu0
    %1316 = vmatprep.mubr.bf16.mxu0 %v1161
    %1317 = vmatmul.mubr.bf16.gmra.mrb[0].mxu0 %v1160
    %v1318 = vpop.f32.mrb[0].mxu0
    %v1319 = vadd.f32 0.0, %v1318
    %v1320 = vpop.f32.mrb[0].mxu0
    %v1321 = vpop.f32.mrb[0].mxu0
    %v1322 = vadd.f32 0.0, %v1321
    %v1323 = vpop.f32.mrb[0].mxu0
    %1324 = vmatprep.mubr.bf16.mxu0 %v1163
    %1325 = vmatmul.mubr.bf16.gmra.mrb[0].mxu0 %v1162
    %v1326 = vpop.f32.mrb[0].mxu0
    %v1327 = vadd.f32 0.0, %v1326
    %v1328 = vpop.f32.mrb[0].mxu0
    %v1329 = vpop.f32.mrb[0].mxu0
    %v1330 = vadd.f32 0.0, %v1329
    %v1331 = vpop.f32.mrb[0].mxu0
    %1332 = vmatprep.mubr.bf16.mxu0 %v1165
    %1333 = vmatmul.mubr.bf16.gmra.mrb[0].mxu0 %v1164
    %v1334 = vpop.f32.mrb[0].mxu0
    %v1335 = vadd.f32 0.0, %v1334
    %v1336 = vpop.f32.mrb[0].mxu0
    %v1337 = vpop.f32.mrb[0].mxu0
    %v1338 = vadd.f32 0.0, %v1337
    %v1339 = vpop.f32.mrb[0].mxu0
    %1340 = vmatprep.mubr.bf16.mxu0 %v1167
    %1341 = vmatmul.mubr.bf16.gmra.mrb[0].mxu0 %v1166
    %v1342 = vpop.f32.mrb[0].mxu0
    %v1343 = vadd.f32 0.0, %v1342
    %v1344 = vpop.f32.mrb[0].mxu0
    %v1345 = vpop.f32.mrb[0].mxu0
    %v1346 = vadd.f32 0.0, %v1345
    %v1347 = vpop.f32.mrb[0].mxu0
    %1348 = vmatprep.mubr.bf16.mxu0 %v1169
    %1349 = vmatmul.mubr.bf16.gmra.mrb[0].mxu0 %v1168
    %v1350 = vpop.f32.mrb[0].mxu0
    %v1351 = vadd.f32 0.0, %v1350
    %v1352 = vpop.f32.mrb[0].mxu0
    %v1353 = vpop.f32.mrb[0].mxu0
    %v1354 = vadd.f32 0.0, %v1353
    %v1355 = vpop.f32.mrb[0].mxu0
    %1356 = vmatprep.mubr.bf16.mxu0 %v1171
    %1357 = vmatmul.mubr.bf16.gmra.mrb[0].mxu0 %v1170
    %v1358 = vpop.f32.mrb[0].mxu0
    %v1359 = vadd.f32 0.0, %v1358
    %v1360 = vpop.f32.mrb[0].mxu0
    %v1361 = vpop.f32.mrb[0].mxu0
    %v1362 = vadd.f32 0.0, %v1361
    %v1363 = vpop.f32.mrb[0].mxu0
    %1364 = vdwg.mxu0
    %v1365 = vadd.f32 %v878, %v1303
    %v1366 = vadd.f32 %v881, %v1306
    %v1367 = vadd.f32 %v886, %v1311
    %v1368 = vadd.f32 %v889, %v1314
    %v1369 = vadd.f32 %v894, %v1319
    %v1370 = vadd.f32 %v897, %v1322
    %v1371 = vadd.f32 %v902, %v1327
    %v1372 = vadd.f32 %v905, %v1330
    %v1373 = vadd.f32 %v910, %v1335
    %v1374 = vadd.f32 %v913, %v1338
    %v1375 = vadd.f32 %v918, %v1343
    %v1376 = vadd.f32 %v921, %v1346
    %v1377 = vadd.f32 %v926, %v1351
    %v1378 = vadd.f32 %v929, %v1354
    %v1379 = vadd.f32 %v934, %v1359
    %v1380 = vadd.f32 %v937, %v1362
    %s1381 = scalar_lea.vmem %s1, 24
    %v1382 = vld [vmem:[%s1381] sm:$0xff]
    %v1383 = vld [vmem:[%s1381 + $0x20] sm:$0xff]
    %v1384 = vld [vmem:[%s1381 + $0x40] sm:$0xff]
    %v1385 = vld [vmem:[%s1381 + $0x60] sm:$0xff]
    %s1386 = scalar_lea.vmem %s2, 6
    %v1387 = vld [vmem:[%s1386] sm:$0x3]
    %v1389 = vlaneseq
    %v1390 = vshrl.u32 %v1389, 7
    %v1391 = vsub.s32 0, %v1390
    %v1392 = vrot.slane %v1387, %v1391
    %v1393 = vlaneseq
    %v1394 = vshrl.u32 %v1393, 7
    %v1395 = vsub.s32 1, %v1394
    %v1396 = vrot.slane %v1387, %v1395
    %v1403 = vunpack.c.l.b16 %v1382
    %v1404 = vunpack.c.h.b16 %v1382
    %v1405 = vunpack.c.l.b16 %v1383
    %v1406 = vunpack.c.h.b16 %v1383
    %v1407 = vunpack.c.l.b16 %v1384
    %v1408 = vunpack.c.h.b16 %v1384
    %v1409 = vunpack.c.l.b16 %v1385
    %v1410 = vunpack.c.h.b16 %v1385
    %v1411 = vpack.c.b16 %v1405, %v1403
    %v1412 = vpack.c.b16 %v1406, %v1404
    %v1413 = vpack.c.b16 %v1409, %v1407
    %v1414 = vpack.c.b16 %v1410, %v1408
    %1419 = vmatprep.subr.bf16.mxu0 %v1412
    %1420 = vmatpush1.bf16.msra.mxu0 %v1411
    %1421 = vmatprep.subr.bf16.mxu0 %v1414
    %1422 = vmatpush1.bf16.msra.mxu0 %v1413
    %1423 = vmatprep.subr.bf16.mxu0 0
    %1424 = vmatpush1.bf16.msra.mxu0 0
    %1425 = vmatprep.subr.bf16.mxu0 0
    %1426 = vmatpush1.bf16.msra.mxu0 0
    %1427 = vmatprep.subr.bf16.mxu0 0
    %1428 = vmatpush1.bf16.msra.mxu0 0
    %1429 = vmatprep.subr.bf16.mxu0 0
    %1430 = vmatpush1.bf16.msra.mxu0 0
    %1431 = vmatprep.subr.bf16.mxu0 0
    %1432 = vmatpush1.bf16.msra.mxu0 0
    %1433 = vmatprep.subr.bf16.mxu0 0
    %1434 = vmatpush1.bf16.msra.mxu0 0
    %1435 = vmatprep.subr.bf16.mxu0 0
    %1436 = vmatpush1.bf16.msra.mxu0 0
    %1437 = vmatprep.subr.bf16.mxu0 0
    %1438 = vmatpush1.bf16.msra.mxu0 0
    %1439 = vmatprep.subr.bf16.mxu0 0
    %1440 = vmatpush1.bf16.msra.mxu0 0
    %1441 = vmatprep.subr.bf16.mxu0 0
    %1442 = vmatpush1.bf16.msra.mxu0 0
    %1443 = vmatprep.subr.bf16.mxu0 0
    %1444 = vmatpush1.bf16.msra.mxu0 0
    %1445 = vmatprep.subr.bf16.mxu0 0
    %1446 = vmatpush1.bf16.msra.mxu0 0
    %1447 = vmatprep.subr.bf16.mxu0 0
    %1448 = vmatpush1.bf16.msra.mxu0 0
    %1449 = vmatprep.subr.bf16.mxu0 0
    %1450 = vmatpush1.bf16.msra.mxu0 0
    %1451 = vmatprep.mubr.bf16.mxu0 0
    %1452 = vmatmul.mubr.bf16.gmra.mrb[0].mxu0 %v106
    %v1453 = vpop.f32.mrb[0].mxu0
    %v1454 = vadd.f32 %v1392, %v1453
    %v1455 = vpop.f32.mrb[0].mxu0
    %v1456 = vadd.f32 %v1396, %v1455
    %v1457 = vpop.f32.mrb[0].mxu0
    %v1458 = vadd.f32 %v1392, %v1457
    %v1459 = vpop.f32.mrb[0].mxu0
    %v1460 = vadd.f32 %v1396, %v1459
    %1461 = vmatprep.mubr.bf16.mxu0 0
    %1462 = vmatmul.mubr.bf16.gmra.mrb[0].mxu0 %v109
    %v1463 = vpop.f32.mrb[0].mxu0
    %v1464 = vadd.f32 %v1392, %v1463
    %v1465 = vpop.f32.mrb[0].mxu0
    %v1466 = vadd.f32 %v1396, %v1465
    %v1467 = vpop.f32.mrb[0].mxu0
    %v1468 = vadd.f32 %v1392, %v1467
    %v1469 = vpop.f32.mrb[0].mxu0
    %v1470 = vadd.f32 %v1396, %v1469
    %1471 = vmatprep.mubr.bf16.mxu0 0
    %1472 = vmatmul.mubr.bf16.gmra.mrb[0].mxu0 %v112
    %v1473 = vpop.f32.mrb[0].mxu0
    %v1474 = vadd.f32 %v1392, %v1473
    %v1475 = vpop.f32.mrb[0].mxu0
    %v1476 = vadd.f32 %v1396, %v1475
    %v1477 = vpop.f32.mrb[0].mxu0
    %v1478 = vadd.f32 %v1392, %v1477
    %v1479 = vpop.f32.mrb[0].mxu0
    %v1480 = vadd.f32 %v1396, %v1479
    %1481 = vmatprep.mubr.bf16.mxu0 0
    %1482 = vmatmul.mubr.bf16.gmra.mrb[0].mxu0 %v115
    %v1483 = vpop.f32.mrb[0].mxu0
    %v1484 = vadd.f32 %v1392, %v1483
    %v1485 = vpop.f32.mrb[0].mxu0
    %v1486 = vadd.f32 %v1396, %v1485
    %v1487 = vpop.f32.mrb[0].mxu0
    %v1488 = vadd.f32 %v1392, %v1487
    %v1489 = vpop.f32.mrb[0].mxu0
    %v1490 = vadd.f32 %v1396, %v1489
    %1491 = vmatprep.mubr.bf16.mxu0 0
    %1492 = vmatmul.mubr.bf16.gmra.mrb[0].mxu0 %v118
    %v1493 = vpop.f32.mrb[0].mxu0
    %v1494 = vadd.f32 %v1392, %v1493
    %v1495 = vpop.f32.mrb[0].mxu0
    %v1496 = vadd.f32 %v1396, %v1495
    %v1497 = vpop.f32.mrb[0].mxu0
    %v1498 = vadd.f32 %v1392, %v1497
    %v1499 = vpop.f32.mrb[0].mxu0
    %v1500 = vadd.f32 %v1396, %v1499
    %1501 = vmatprep.mubr.bf16.mxu0 0
    %1502 = vmatmul.mubr.bf16.gmra.mrb[0].mxu0 %v121
    %v1503 = vpop.f32.mrb[0].mxu0
    %v1504 = vadd.f32 %v1392, %v1503
    %v1505 = vpop.f32.mrb[0].mxu0
    %v1506 = vadd.f32 %v1396, %v1505
    %v1507 = vpop.f32.mrb[0].mxu0
    %v1508 = vadd.f32 %v1392, %v1507
    %v1509 = vpop.f32.mrb[0].mxu0
    %v1510 = vadd.f32 %v1396, %v1509
    %1511 = vmatprep.mubr.bf16.mxu0 0
    %1512 = vmatmul.mubr.bf16.gmra.mrb[0].mxu0 %v124
    %v1513 = vpop.f32.mrb[0].mxu0
    %v1514 = vadd.f32 %v1392, %v1513
    %v1515 = vpop.f32.mrb[0].mxu0
    %v1516 = vadd.f32 %v1396, %v1515
    %v1517 = vpop.f32.mrb[0].mxu0
    %v1518 = vadd.f32 %v1392, %v1517
    %v1519 = vpop.f32.mrb[0].mxu0
    %v1520 = vadd.f32 %v1396, %v1519
    %1521 = vmatprep.mubr.bf16.mxu0 0
    %1522 = vmatmul.mubr.bf16.gmra.mrb[0].mxu0 %v127
    %v1523 = vpop.f32.mrb[0].mxu0
    %v1524 = vadd.f32 %v1392, %v1523
    %v1525 = vpop.f32.mrb[0].mxu0
    %v1526 = vadd.f32 %v1396, %v1525
    %v1527 = vpop.f32.mrb[0].mxu0
    %v1528 = vadd.f32 %v1392, %v1527
    %v1529 = vpop.f32.mrb[0].mxu0
    %v1530 = vadd.f32 %v1396, %v1529
    %1531 = vdwg.mxu0
    %v1532 = vmax.f32 %v1454, 0.0
    %v1533 = vmax.f32 %v1456, 0.0
    %v1534 = vmax.f32 %v1458, 0.0
    %v1535 = vmax.f32 %v1460, 0.0
    %v1536 = vmax.f32 %v1464, 0.0
    %v1537 = vmax.f32 %v1466, 0.0
    %v1538 = vmax.f32 %v1468, 0.0
    %v1539 = vmax.f32 %v1470, 0.0
    %v1540 = vmax.f32 %v1474, 0.0
    %v1541 = vmax.f32 %v1476, 0.0
    %v1542 = vmax.f32 %v1478, 0.0
    %v1543 = vmax.f32 %v1480, 0.0
    %v1544 = vmax.f32 %v1484, 0.0
    %v1545 = vmax.f32 %v1486, 0.0
    %v1546 = vmax.f32 %v1488, 0.0
    %v1547 = vmax.f32 %v1490, 0.0
    %v1548 = vmax.f32 %v1494, 0.0
    %v1549 = vmax.f32 %v1496, 0.0
    %v1550 = vmax.f32 %v1498, 0.0
    %v1551 = vmax.f32 %v1500, 0.0
    %v1552 = vmax.f32 %v1504, 0.0
    %v1553 = vmax.f32 %v1506, 0.0
    %v1554 = vmax.f32 %v1508, 0.0
    %v1555 = vmax.f32 %v1510, 0.0
    %v1556 = vmax.f32 %v1514, 0.0
    %v1557 = vmax.f32 %v1516, 0.0
    %v1558 = vmax.f32 %v1518, 0.0
    %v1559 = vmax.f32 %v1520, 0.0
    %v1560 = vmax.f32 %v1524, 0.0
    %v1561 = vmax.f32 %v1526, 0.0
    %v1562 = vmax.f32 %v1528, 0.0
    %v1563 = vmax.f32 %v1530, 0.0
    %s1564 = scalar_lea.vmem [#allocation3], 384
    %v1565 = vld [vmem:[%s1564] sm:$0xf]
    %v1566 = vld [vmem:[%s1564 + $0x4] sm:$0xf]
    %v1567 = vld [vmem:[%s1564 + $0x8] sm:$0xf]
    %v1568 = vld [vmem:[%s1564 + $0xc] sm:$0xf]
    %v1569 = vld [vmem:[%s1564 + $0x10] sm:$0xf]
    %v1570 = vld [vmem:[%s1564 + $0x14] sm:$0xf]
    %v1571 = vld [vmem:[%s1564 + $0x18] sm:$0xf]
    %v1572 = vld [vmem:[%s1564 + $0x1c] sm:$0xf]
    %v1573 = vld [vmem:[%s1564 + $0x20] sm:$0xf]
    %v1574 = vld [vmem:[%s1564 + $0x24] sm:$0xf]
    %v1575 = vld [vmem:[%s1564 + $0x28] sm:$0xf]
    %v1576 = vld [vmem:[%s1564 + $0x2c] sm:$0xf]
    %v1577 = vld [vmem:[%s1564 + $0x30] sm:$0xf]
    %v1578 = vld [vmem:[%s1564 + $0x34] sm:$0xf]
    %v1579 = vld [vmem:[%s1564 + $0x38] sm:$0xf]
    %v1580 = vld [vmem:[%s1564 + $0x3c] sm:$0xf]
    %v1581 = vld [vmem:[%s1564 + $0x40] sm:$0xf]
    %v1582 = vld [vmem:[%s1564 + $0x44] sm:$0xf]
    %v1583 = vld [vmem:[%s1564 + $0x48] sm:$0xf]
    %v1584 = vld [vmem:[%s1564 + $0x4c] sm:$0xf]
    %v1585 = vld [vmem:[%s1564 + $0x50] sm:$0xf]
    %v1586 = vld [vmem:[%s1564 + $0x54] sm:$0xf]
    %v1587 = vld [vmem:[%s1564 + $0x58] sm:$0xf]
    %v1588 = vld [vmem:[%s1564 + $0x5c] sm:$0xf]
    %v1589 = vld [vmem:[%s1564 + $0x60] sm:$0xf]
    %v1590 = vld [vmem:[%s1564 + $0x64] sm:$0xf]
    %v1591 = vld [vmem:[%s1564 + $0x68] sm:$0xf]
    %v1592 = vld [vmem:[%s1564 + $0x6c] sm:$0xf]
    %v1593 = vld [vmem:[%s1564 + $0x70] sm:$0xf]
    %v1594 = vld [vmem:[%s1564 + $0x74] sm:$0xf]
    %v1595 = vld [vmem:[%s1564 + $0x78] sm:$0xf]
    %v1596 = vld [vmem:[%s1564 + $0x7c] sm:$0xf]
    %v1597 = vpack.c.bf16 %v1534, %v1532
    %v1598 = vpack.c.bf16 %v1535, %v1533
    %v1599 = vpack.c.bf16 %v1538, %v1536
    %v1600 = vpack.c.bf16 %v1539, %v1537
    %v1601 = vpack.c.bf16 %v1542, %v1540
    %v1602 = vpack.c.bf16 %v1543, %v1541
    %v1603 = vpack.c.bf16 %v1546, %v1544
    %v1604 = vpack.c.bf16 %v1547, %v1545
    %v1605 = vpack.c.bf16 %v1550, %v1548
    %v1606 = vpack.c.bf16 %v1551, %v1549
    %v1607 = vpack.c.bf16 %v1554, %v1552
    %v1608 = vpack.c.bf16 %v1555, %v1553
    %v1609 = vpack.c.bf16 %v1558, %v1556
    %v1610 = vpack.c.bf16 %v1559, %v1557
    %v1611 = vpack.c.bf16 %v1562, %v1560
    %v1612 = vpack.c.bf16 %v1563, %v1561
    %v1645 = vunpack.c.l.b16 %v1565
    %v1646 = vunpack.c.l.b16 %v1566
    %v1647 = vunpack.c.l.b16 %v1567
    %v1648 = vunpack.c.l.b16 %v1568
    %v1649 = vunpack.c.l.b16 %v1569
    %v1650 = vunpack.c.l.b16 %v1570
    %v1651 = vunpack.c.l.b16 %v1571
    %v1652 = vunpack.c.l.b16 %v1572
    %v1653 = vunpack.c.l.b16 %v1573
    %v1654 = vunpack.c.l.b16 %v1574
    %v1655 = vunpack.c.l.b16 %v1575
    %v1656 = vunpack.c.l.b16 %v1576
    %v1657 = vunpack.c.l.b16 %v1577
    %v1658 = vunpack.c.l.b16 %v1578
    %v1659 = vunpack.c.l.b16 %v1579
    %v1660 = vunpack.c.l.b16 %v1580
    %v1661 = vunpack.c.l.b16 %v1581
    %v1662 = vunpack.c.l.b16 %v1582
    %v1663 = vunpack.c.l.b16 %v1583
    %v1664 = vunpack.c.l.b16 %v1584
    %v1665 = vunpack.c.l.b16 %v1585
    %v1666 = vunpack.c.l.b16 %v1586
    %v1667 = vunpack.c.l.b16 %v1587
    %v1668 = vunpack.c.l.b16 %v1588
    %v1669 = vunpack.c.l.b16 %v1589
    %v1670 = vunpack.c.l.b16 %v1590
    %v1671 = vunpack.c.l.b16 %v1591
    %v1672 = vunpack.c.l.b16 %v1592
    %v1673 = vunpack.c.l.b16 %v1593
    %v1674 = vunpack.c.l.b16 %v1594
    %v1675 = vunpack.c.l.b16 %v1595
    %v1676 = vunpack.c.l.b16 %v1596
    %v1677 = vpack.c.b16 %v1646, %v1645
    %v1678 = vpack.c.b16 %v1648, %v1647
    %v1679 = vpack.c.b16 %v1650, %v1649
    %v1680 = vpack.c.b16 %v1652, %v1651
    %v1681 = vpack.c.b16 %v1654, %v1653
    %v1682 = vpack.c.b16 %v1656, %v1655
    %v1683 = vpack.c.b16 %v1658, %v1657
    %v1684 = vpack.c.b16 %v1660, %v1659
    %v1685 = vpack.c.b16 %v1662, %v1661
    %v1686 = vpack.c.b16 %v1664, %v1663
    %v1687 = vpack.c.b16 %v1666, %v1665
    %v1688 = vpack.c.b16 %v1668, %v1667
    %v1689 = vpack.c.b16 %v1670, %v1669
    %v1690 = vpack.c.b16 %v1672, %v1671
    %v1691 = vpack.c.b16 %v1674, %v1673
    %v1692 = vpack.c.b16 %v1676, %v1675
    %1709 = vmatprep.subr.bf16.mxu0 0
    %1710 = vmatpush1.bf16.msra.mxu0 %v1677
    %1711 = vmatprep.subr.bf16.mxu0 0
    %1712 = vmatpush1.bf16.msra.mxu0 %v1678
    %1713 = vmatprep.subr.bf16.mxu0 0
    %1714 = vmatpush1.bf16.msra.mxu0 %v1679
    %1715 = vmatprep.subr.bf16.mxu0 0
    %1716 = vmatpush1.bf16.msra.mxu0 %v1680
    %1717 = vmatprep.subr.bf16.mxu0 0
    %1718 = vmatpush1.bf16.msra.mxu0 %v1681
    %1719 = vmatprep.subr.bf16.mxu0 0
    %1720 = vmatpush1.bf16.msra.mxu0 %v1682
    %1721 = vmatprep.subr.bf16.mxu0 0
    %1722 = vmatpush1.bf16.msra.mxu0 %v1683
    %1723 = vmatprep.subr.bf16.mxu0 0
    %1724 = vmatpush1.bf16.msra.mxu0 %v1684
    %1725 = vmatprep.subr.bf16.mxu0 0
    %1726 = vmatpush1.bf16.msra.mxu0 %v1685
    %1727 = vmatprep.subr.bf16.mxu0 0
    %1728 = vmatpush1.bf16.msra.mxu0 %v1686
    %1729 = vmatprep.subr.bf16.mxu0 0
    %1730 = vmatpush1.bf16.msra.mxu0 %v1687
    %1731 = vmatprep.subr.bf16.mxu0 0
    %1732 = vmatpush1.bf16.msra.mxu0 %v1688
    %1733 = vmatprep.subr.bf16.mxu0 0
    %1734 = vmatpush1.bf16.msra.mxu0 %v1689
    %1735 = vmatprep.subr.bf16.mxu0 0
    %1736 = vmatpush1.bf16.msra.mxu0 %v1690
    %1737 = vmatprep.subr.bf16.mxu0 0
    %1738 = vmatpush1.bf16.msra.mxu0 %v1691
    %1739 = vmatprep.subr.bf16.mxu0 0
    %1740 = vmatpush1.bf16.msra.mxu0 %v1692
    %1741 = vmatprep.mubr.bf16.mxu0 %v1598
    %1742 = vmatmul.mubr.bf16.gmra.mrb[0].mxu0 %v1597
    %v1743 = vpop.f32.mrb[0].mxu0
    %v1744 = vadd.f32 0.0, %v1743
    %v1745 = vpop.f32.mrb[0].mxu0
    %v1746 = vpop.f32.mrb[0].mxu0
    %v1747 = vadd.f32 0.0, %v1746
    %v1748 = vpop.f32.mrb[0].mxu0
    %1749 = vmatprep.mubr.bf16.mxu0 %v1600
    %1750 = vmatmul.mubr.bf16.gmra.mrb[0].mxu0 %v1599
    %v1751 = vpop.f32.mrb[0].mxu0
    %v1752 = vadd.f32 0.0, %v1751
    %v1753 = vpop.f32.mrb[0].mxu0
    %v1754 = vpop.f32.mrb[0].mxu0
    %v1755 = vadd.f32 0.0, %v1754
    %v1756 = vpop.f32.mrb[0].mxu0
    %1757 = vmatprep.mubr.bf16.mxu0 %v1602
    %1758 = vmatmul.mubr.bf16.gmra.mrb[0].mxu0 %v1601
    %v1759 = vpop.f32.mrb[0].mxu0
    %v1760 = vadd.f32 0.0, %v1759
    %v1761 = vpop.f32.mrb[0].mxu0
    %v1762 = vpop.f32.mrb[0].mxu0
    %v1763 = vadd.f32 0.0, %v1762
    %v1764 = vpop.f32.mrb[0].mxu0
    %1765 = vmatprep.mubr.bf16.mxu0 %v1604
    %1766 = vmatmul.mubr.bf16.gmra.mrb[0].mxu0 %v1603
    %v1767 = vpop.f32.mrb[0].mxu0
    %v1768 = vadd.f32 0.0, %v1767
    %v1769 = vpop.f32.mrb[0].mxu0
    %v1770 = vpop.f32.mrb[0].mxu0
    %v1771 = vadd.f32 0.0, %v1770
    %v1772 = vpop.f32.mrb[0].mxu0
    %1773 = vmatprep.mubr.bf16.mxu0 %v1606
    %1774 = vmatmul.mubr.bf16.gmra.mrb[0].mxu0 %v1605
    %v1775 = vpop.f32.mrb[0].mxu0
    %v1776 = vadd.f32 0.0, %v1775
    %v1777 = vpop.f32.mrb[0].mxu0
    %v1778 = vpop.f32.mrb[0].mxu0
    %v1779 = vadd.f32 0.0, %v1778
    %v1780 = vpop.f32.mrb[0].mxu0
    %1781 = vmatprep.mubr.bf16.mxu0 %v1608
    %1782 = vmatmul.mubr.bf16.gmra.mrb[0].mxu0 %v1607
    %v1783 = vpop.f32.mrb[0].mxu0
    %v1784 = vadd.f32 0.0, %v1783
    %v1785 = vpop.f32.mrb[0].mxu0
    %v1786 = vpop.f32.mrb[0].mxu0
    %v1787 = vadd.f32 0.0, %v1786
    %v1788 = vpop.f32.mrb[0].mxu0
    %1789 = vmatprep.mubr.bf16.mxu0 %v1610
    %1790 = vmatmul.mubr.bf16.gmra.mrb[0].mxu0 %v1609
    %v1791 = vpop.f32.mrb[0].mxu0
    %v1792 = vadd.f32 0.0, %v1791
    %v1793 = vpop.f32.mrb[0].mxu0
    %v1794 = vpop.f32.mrb[0].mxu0
    %v1795 = vadd.f32 0.0, %v1794
    %v1796 = vpop.f32.mrb[0].mxu0
    %1797 = vmatprep.mubr.bf16.mxu0 %v1612
    %1798 = vmatmul.mubr.bf16.gmra.mrb[0].mxu0 %v1611
    %v1799 = vpop.f32.mrb[0].mxu0
    %v1800 = vadd.f32 0.0, %v1799
    %v1801 = vpop.f32.mrb[0].mxu0
    %v1802 = vpop.f32.mrb[0].mxu0
    %v1803 = vadd.f32 0.0, %v1802
    %v1804 = vpop.f32.mrb[0].mxu0
    %1805 = vdwg.mxu0
    %v1806 = vadd.f32 %v1365, %v1744
    %v1807 = vadd.f32 %v1366, %v1747
    %v1808 = vadd.f32 %v1367, %v1752
    %v1809 = vadd.f32 %v1368, %v1755
    %v1810 = vadd.f32 %v1369, %v1760
    %v1811 = vadd.f32 %v1370, %v1763
    %v1812 = vadd.f32 %v1371, %v1768
    %v1813 = vadd.f32 %v1372, %v1771
    %v1814 = vadd.f32 %v1373, %v1776
    %v1815 = vadd.f32 %v1374, %v1779
    %v1816 = vadd.f32 %v1375, %v1784
    %v1817 = vadd.f32 %v1376, %v1787
    %v1818 = vadd.f32 %v1377, %v1792
    %v1819 = vadd.f32 %v1378, %v1795
    %v1820 = vadd.f32 %v1379, %v1800
    %v1821 = vadd.f32 %v1380, %v1803
    %v1822 = vld [vmem:[%s4] sm:$0x1]
    %v1824 = vlaneseq
    %v1825 = vshrl.u32 %v1824, 7
    %v1826 = vsub.s32 0, %v1825
    %v1827 = vrot.slane %v1822, %v1826
    %v1829 = vadd.f32 %v1806, %v1827
    %v1830 = vadd.f32 %v1807, %v1827
    %v1831 = vadd.f32 %v1808, %v1827
    %v1832 = vadd.f32 %v1809, %v1827
    %v1833 = vadd.f32 %v1810, %v1827
    %v1834 = vadd.f32 %v1811, %v1827
    %v1835 = vadd.f32 %v1812, %v1827
    %v1836 = vadd.f32 %v1813, %v1827
    %v1837 = vadd.f32 %v1814, %v1827
    %v1838 = vadd.f32 %v1815, %v1827
    %v1839 = vadd.f32 %v1816, %v1827
    %v1840 = vadd.f32 %v1817, %v1827
    %v1841 = vadd.f32 %v1818, %v1827
    %v1842 = vadd.f32 %v1819, %v1827
    %v1843 = vadd.f32 %v1820, %v1827
    %v1844 = vadd.f32 %v1821, %v1827
    %v1845 = vmax.f32 %v1829, 0.0
    %v1846 = vmax.f32 %v1830, 0.0
    %v1847 = vmax.f32 %v1831, 0.0
    %v1848 = vmax.f32 %v1832, 0.0
    %v1849 = vmax.f32 %v1833, 0.0
    %v1850 = vmax.f32 %v1834, 0.0
    %v1851 = vmax.f32 %v1835, 0.0
    %v1852 = vmax.f32 %v1836, 0.0
    %v1853 = vmax.f32 %v1837, 0.0
    %v1854 = vmax.f32 %v1838, 0.0
    %v1855 = vmax.f32 %v1839, 0.0
    %v1856 = vmax.f32 %v1840, 0.0
    %v1857 = vmax.f32 %v1841, 0.0
    %v1858 = vmax.f32 %v1842, 0.0
    %v1859 = vmax.f32 %v1843, 0.0
    %v1860 = vmax.f32 %v1844, 0.0
    %v1861 = vld [vmem:[%s5] sm:$0x1]
    %v1863 = vlaneseq
    %v1864 = vshrl.u32 %v1863, 7
    %v1865 = vsub.s32 0, %v1864
    %v1866 = vrot.slane %v1861, %v1865
    %v1868 = vmul.f32 %v1845, %v1866
    %v1869 = vmul.f32 %v1846, %v1866
    %v1870 = vmul.f32 %v1847, %v1866
    %v1871 = vmul.f32 %v1848, %v1866
    %v1872 = vmul.f32 %v1849, %v1866
    %v1873 = vmul.f32 %v1850, %v1866
    %v1874 = vmul.f32 %v1851, %v1866
    %v1875 = vmul.f32 %v1852, %v1866
    %v1876 = vmul.f32 %v1853, %v1866
    %v1877 = vmul.f32 %v1854, %v1866
    %v1878 = vmul.f32 %v1855, %v1866
    %v1879 = vmul.f32 %v1856, %v1866
    %v1880 = vmul.f32 %v1857, %v1866
    %v1881 = vmul.f32 %v1858, %v1866
    %v1882 = vmul.f32 %v1859, %v1866
    %v1883 = vmul.f32 %v1860, %v1866
    %1884 = vxpose.xlu0.b32.start [1/16] %v1868, 128
    %1885 = vxpose.xlu0.b32.cont [2/16] %v1869, 128
    %1886 = vxpose.xlu0.b32.cont [3/16] %v1870, 128
    %1887 = vxpose.xlu0.b32.cont [4/16] %v1871, 128
    %1888 = vxpose.xlu0.b32.cont [5/16] %v1872, 128
    %1889 = vxpose.xlu0.b32.cont [6/16] %v1873, 128
    %1890 = vxpose.xlu0.b32.cont [7/16] %v1874, 128
    %1891 = vxpose.xlu0.b32.cont [8/16] %v1875, 128
    %1892 = vxpose.xlu0.b32.cont [9/16] %v1876, 128
    %1893 = vxpose.xlu0.b32.cont [10/16] %v1877, 128
    %1894 = vxpose.xlu0.b32.cont [11/16] %v1878, 128
    %1895 = vxpose.xlu0.b32.cont [12/16] %v1879, 128
    %1896 = vxpose.xlu0.b32.cont [13/16] %v1880, 128
    %1897 = vxpose.xlu0.b32.cont [14/16] %v1881, 128
    %1898 = vxpose.xlu0.b32.cont [15/16] %v1882, 128
    %1899 = vxpose.xlu0.b32.end [16/16] %v1883, 128
    %v1900 = vpop.trf.xlu0
    %v1901 = vpop.trf.xlu0
    %v1902 = vpop.trf.xlu0
    %v1903 = vpop.trf.xlu0
    %v1904 = vpop.trf.xlu0
    %v1905 = vpop.trf.xlu0
    %v1906 = vpop.trf.xlu0
    %v1907 = vpop.trf.xlu0
    %v1908 = vpop.trf.xlu0
    %v1909 = vpop.trf.xlu0
    %v1910 = vpop.trf.xlu0
    %v1911 = vpop.trf.xlu0
    %v1912 = vpop.trf.xlu0
    %v1913 = vpop.trf.xlu0
    %v1914 = vpop.trf.xlu0
    %v1915 = vpop.trf.xlu0
    %v1916 = vadd.f32 %v1900, %v1901
    %v1917 = vadd.f32 %v1916, %v1902
    %v1918 = vadd.f32 %v1917, %v1903
    %v1919 = vadd.f32 %v1918, %v1904
    %v1920 = vadd.f32 %v1919, %v1905
    %v1921 = vadd.f32 %v1920, %v1906
    %v1922 = vadd.f32 %v1921, %v1907
    %v1923 = vadd.f32 %v1922, %v1908
    %v1924 = vadd.f32 %v1923, %v1909
    %v1925 = vadd.f32 %v1924, %v1910
    %v1926 = vadd.f32 %v1925, %v1911
    %v1927 = vadd.f32 %v1926, %v1912
    %v1928 = vadd.f32 %v1927, %v1913
    %v1929 = vadd.f32 %v1928, %v1914
    %v1930 = vadd.f32 %v1929, %v1915
    %v1931 = vrot.slane %v1930, 4
    %v1932 = vadd.f32 %v1930, %v1931
    %v1933 = vrot.slane %v1932, 2
    %v1934 = vadd.f32 %v1932, %v1933
    %v1935 = vrot.slane %v1934, 1
    %v1936 = vadd.f32 %v1934, %v1935
    %v1937 = vld [vmem:[#allocation2] sm:$0x1]
    %1939 = vset.pattern.permute.xlu0 0
    %1940 = vperm.xlu0 %1939, %v1937
    %v1941 = vpop.permute.xlu0 %1940
    %v1943 = vlaneseq
    %v1944 = vshrl.u32 %v1943, 7
    %v1945 = vsub.s32 0, %v1944
    %v1946 = vrot.slane %v1941, %v1945
    %v1947 = vadd.f32 %v1936, %v1946
    %v1948 = vxor.u32 %v1947, 2147483648
    %v1949 = vmul.f32 %v1948, 1.442695
    %v1950 = vpow.pop %v1949
    %v1951 = vadd.f32 %v1950, 1.0
    %v1952 = vrcp.pop %v1951
    %v1953 = vmul.f32 1.0, %v1952
    %1954 = vst [vmem:[#allocation6] sm:$0x1] %v1953
    // Predicated region
    $region34: #{tpu_custom_call.1} parent=1 // pred_check
      _
    $region35: #{tpu_custom_call.1} parent=1 // pred_check_branch
      %1956 = sbr.rel (0) target = $region37
    $region36: #{tpu_custom_call.1} parent=1 // pred_region
      %s1958 = ssub.s32 16, 16
      %1959 = vsyncadd [#allocation5], %s1958
      %s1961 = sshll.u32 [#allocation6], 4
      %s1962 = int_to_ptr.vmem [resolvable:$true] %s1961
      %1964 = dma.vmem_to_hbm [thread:$0]  %s1962, 16, %s7, [#allocation5]
    $region37: #{tpu_custom_call.1} parent=1 // pred_fallthru
      _
    // Predicated region
    $region38: #{tpu_custom_call.1} parent=1 // pred_check
      _
    $region39: #{tpu_custom_call.1} parent=1 // pred_check_branch
      %1966 = sbr.rel (0) target = $region41
    $region40: #{tpu_custom_call.1} parent=1 // pred_region
      %1967 = dma.done [#allocation5], 16
    $region41: #{tpu_custom_call.1} parent=1 // pred_fallthru
      _
    %1968 = vsyncpa [#allocation4], 1
    %1969 = vsyncpa [#allocation5], 1

</llo_original>
